<compile_context>
chip_gen: v5e
topology: v5e:2x2
jax: 0.10.0
libtpu: 0.0.40
codegen_flags: <defaults>
</compile_context>

<pallas_src>
import jax
import jax.numpy as jnp
from jax.experimental import pallas as pl
from jax.experimental.pallas import tpu as pltpu

H = 50          # true LSTM hidden size (PyTorch model)
HP = 64         # lane-padded hidden size (4*HP = 256 = one clean MXU pass)
C_IN = 3        # model input feature size
C1 = 32         # conv1 channels
C2 = 64         # conv2 channels
OUT = 3         # output size
OUT_PAD = 128   # lane-dense output slab width (sliced back to OUT in wrapper)


def cnn_lstm_kernel(x_ref,
                    w1_ref, b1_ref,
                    w2_ref, b2_ref,
                    wih_ref, bl_ref, whh_ref,
                    wfc_ref, bfc_ref,
                    out_ref,
                    xproj_ref):
    S, TB, _ = x_ref.shape

    # ---------------- conv1 + ReLU + MaxPool(stride=1): VPU only ------------
    # K=3 contraction is ~3/256 of MXU depth -> keep it off the MXU entirely.
    x = x_ref[...]                          # (S, TB, 3) f32
    w1 = w1_ref[...]                        # (6, 32): rows 0..2 tap k=0, 3..5 tap k=1
    ya = (x[:, :, 0:1] * w1[0:1, :] + x[:, :, 1:2] * w1[1:2, :]
          + x[:, :, 2:3] * w1[2:3, :])      # x[t] @ w_k0 -> (S, TB, 32)
    yb = (x[:, :, 0:1] * w1[3:4, :] + x[:, :, 1:2] * w1[4:5, :]
          + x[:, :, 2:3] * w1[5:6, :])      # x[t] @ w_k1 -> (S, TB, 32)
    z1 = jnp.zeros((1, TB, C1), jnp.float32)
    # Conv1d(k=2, padding=1): conv[t] = x_pad[t]@w_k0 + x_pad[t+1]@w_k1, t=0..S
    c1 = (jnp.concatenate([z1, ya], axis=0)
          + jnp.concatenate([yb, z1], axis=0) + b1_ref[...])
    c1 = jnp.maximum(c1, 0.0)               # ReLU, (S+1, TB, 32)
    p1 = jnp.maximum(c1[:S], c1[1:])        # MaxPool1d(2, stride=1) -> (S, TB, 32)

    # ---------- conv2 + ReLU + MaxPool: fused 2-tap bf16 MXU matmul ---------
    y2 = jnp.dot(p1.astype(jnp.bfloat16).reshape(S * TB, C1), w2_ref[...],
                 preferred_element_type=jnp.float32).reshape(S, TB, 2 * C2)
    z2 = jnp.zeros((1, TB, C2), jnp.float32)
    c2 = (jnp.concatenate([z2, y2[:, :, :C2]], axis=0)
          + jnp.concatenate([y2[:, :, C2:], z2], axis=0) + b2_ref[...])
    c2 = jnp.maximum(c2, 0.0)               # (S+1, TB, 64)
    p2 = jnp.maximum(c2[:S], c2[1:])        # (S, TB, 64)

    # -------- hoisted LSTM input projection -> VMEM scratch (bounded live) --
    xp = jnp.dot(p2.astype(jnp.bfloat16).reshape(S * TB, C2), wih_ref[...],
                 preferred_element_type=jnp.float32) + bl_ref[...]
    xproj_ref[...] = xp.reshape(S, TB, 4 * HP)

    # ------------- LSTM recurrence, gate layout [i | f | o | g] -------------
    whh = whh_ref[...]                      # (HP, 4*HP) bf16, hoisted out of loop

    def step(t, carry):
        h, c = carry
        gates = xproj_ref[t] + jnp.dot(h.astype(jnp.bfloat16), whh,
                                       preferred_element_type=jnp.float32)
        sig = jax.nn.sigmoid(gates[:, :3 * HP])     # one contiguous EUP region
        i = sig[:, 0 * HP:1 * HP]
        f = sig[:, 1 * HP:2 * HP]
        o = sig[:, 2 * HP:3 * HP]
        g = jnp.tanh(gates[:, 3 * HP:])             # second contiguous region
        c = f * c + i * g
        h = o * jnp.tanh(c)
        return h, c

    h0 = jnp.zeros((TB, HP), jnp.float32)
    c0 = jnp.zeros((TB, HP), jnp.float32)
    h, _ = jax.lax.fori_loop(0, S, step, (h0, c0), unroll=True)

    # ------------- final Linear on last hidden state, lane-dense store ------
    out_ref[...] = (jnp.dot(h.astype(jnp.bfloat16), wfc_ref[...],
                            preferred_element_type=jnp.float32) + bfc_ref[...])


# ------------------------------- wrapper -----------------------------------

def _round_up(n, m):
    return ((n + m - 1) // m) * m


def _num_tensorcores():
    """2 TensorCores per chip on v7x; 1 on v5e/v6e (grid is a serial loop there)."""
    try:
        kind = jax.devices()[0].device_kind.lower().replace(" ", "")
    except Exception:
        return 1
    return 2 if ("v7" in kind or "tpu7" in kind) else 1


def cnn_lstm_forward(x, packed, *, num_grid_steps=None):
    B, S, _ = x.shape
    steps = _num_tensorcores() if num_grid_steps is None else num_grid_steps
    # Whole batch per tile on single-TC chips; one tile per TensorCore on v7x.
    # TB stays a multiple of 8 so (s, tb, c) -> (s*tb, c) reshapes are free.
    TB = min(_round_up(pl.cdiv(B, max(steps, 1)), 8), _round_up(B, 8))
    n_steps = pl.cdiv(B, TB)
    B_pad = TB * n_steps
    if B_pad != B:
        x = jnp.pad(x, ((0, B_pad - B), (0, 0), (0, 0)))
    x_tm = jnp.transpose(x, (1, 0, 2))                # time-major (S, B_pad, C_IN)

    def full_spec(a):
        nd = a.ndim
        return pl.BlockSpec(a.shape, lambda b, _nd=nd: (0,) * _nd)

    out = pl.pallas_call(
        cnn_lstm_kernel,
        out_shape=jax.ShapeDtypeStruct((B_pad, OUT_PAD), jnp.float32),
        grid_spec=pltpu.PrefetchScalarGridSpec(
            num_scalar_prefetch=0,
            grid=(n_steps,),
            in_specs=[pl.BlockSpec((S, TB, C_IN), lambda b: (0, b, 0))]
                     + [full_spec(a) for a in packed],
            out_specs=pl.BlockSpec((TB, OUT_PAD), lambda b: (b, 0)),
            scratch_shapes=[pltpu.VMEM((S, TB, 4 * HP), jnp.float32)],
        ),
        compiler_params=pltpu.CompilerParams(
            dimension_semantics=("parallel",)),   # batch tiles shard across TCs (v7x)
    )(x_tm, *packed)
    return out[:B, :OUT]


# ----------------------------- parameters -----------------------------------

def init_torch_params(key):
    """PyTorch-native parameter shapes for CNNLSTMModel."""
    ks = jax.random.split(key, 10)

    def u(k, shape, fan_in):
        bound = 1.0 / jnp.sqrt(jnp.float32(fan_in))
        return jax.random.uniform(k, shape, jnp.float32, -bound, bound)

    return dict(
        conv1_w=u(ks[0], (C1, C_IN, 2), C_IN * 2),   # (out, in, k)
        conv1_b=u(ks[1], (C1,), C_IN * 2),
        conv2_w=u(ks[2], (C2, C1, 2), C1 * 2),
        conv2_b=u(ks[3], (C2,), C1 * 2),
        w_ih=u(ks[4], (4 * H, C2), H),               # torch gate order i,f,g,o
        w_hh=u(ks[5], (4 * H, H), H),
        b_ih=u(ks[6], (4 * H,), H),
        b_hh=u(ks[7], (4 * H,), H),
        fc_w=u(ks[8], (OUT, H), H),
        fc_b=u(ks[9], (OUT,), H),
    )


def pack_params(p):
    """Repack PyTorch-native weights into the lane-aligned kernel layout."""
    # conv1 (VPU path, f32): rows 0..2 = tap k=0, rows 3..5 = tap k=1.
    w1 = jnp.concatenate([p["conv1_w"][:, :, 0].T,
                          p["conv1_w"][:, :, 1].T], axis=0)            # (6, 32)
    b1 = p["conv1_b"][None, :]                                         # (1, 32)
    # conv2 (MXU path, bf16): taps fused along N -> act @ [w_k0 | w_k1].
    w2 = jnp.concatenate([p["conv2_w"][:, :, 0].T,
                          p["conv2_w"][:, :, 1].T], axis=1).astype(jnp.bfloat16)
    b2 = p["conv2_b"][None, :]                                         # (1, 64)

    # LSTM: repack gates from torch order [i,f,g,o] to [i,f,o,g]; pad each gate
    # block H=50 -> HP=64 lanes with zeros (zeros keep padded c/h exactly 0).
    gate_src = (0, 1, 3, 2)
    wih = jnp.zeros((C2, 4 * HP), jnp.float32)
    whh = jnp.zeros((HP, 4 * HP), jnp.float32)
    bl = jnp.zeros((1, 4 * HP), jnp.float32)
    b_sum = p["b_ih"] + p["b_hh"]
    for dst, src in enumerate(gate_src):
        wih = wih.at[:, dst * HP:dst * HP + H].set(p["w_ih"][src * H:(src + 1) * H, :].T)
        whh = whh.at[:H, dst * HP:dst * HP + H].set(p["w_hh"][src * H:(src + 1) * H, :].T)
        bl = bl.at[0, dst * HP:dst * HP + H].set(b_sum[src * H:(src + 1) * H])
    wih = wih.astype(jnp.bfloat16)
    whh = whh.astype(jnp.bfloat16)

    wfc = (jnp.zeros((HP, OUT_PAD), jnp.float32)
           .at[:H, :OUT].set(p["fc_w"].T).astype(jnp.bfloat16))
    bfc = jnp.zeros((1, OUT_PAD), jnp.float32).at[0, :OUT].set(p["fc_b"])

    return (w1, b1, w2, b2, wih, bl, whh, wfc, bfc)


# ----------------------------- reference ------------------------------------

def ref_forward(x, p):
    """Pure-JAX f32 reference mirroring the PyTorch forward pass (H=50)."""
    B, S, _ = x.shape
    w1a, w1b = p["conv1_w"][:, :, 0].T, p["conv1_w"][:, :, 1].T
    xp = jnp.pad(x, ((0, 0), (1, 1), (0, 0)))
    c1 = jax.nn.relu(xp[:, :S + 1] @ w1a + xp[:, 1:S + 2] @ w1b + p["conv1_b"])
    p1 = jnp.maximum(c1[:, :S], c1[:, 1:])               # MaxPool1d(2, stride=1)
    w2a, w2b = p["conv2_w"][:, :, 0].T, p["conv2_w"][:, :, 1].T
    pp = jnp.pad(p1, ((0, 0), (1, 1), (0, 0)))
    c2 = jax.nn.relu(pp[:, :S + 1] @ w2a + pp[:, 1:S + 2] @ w2b + p["conv2_b"])
    p2 = jnp.maximum(c2[:, :S], c2[:, 1:])
    h = jnp.zeros((B, H), jnp.float32)
    c = jnp.zeros((B, H), jnp.float32)
    for t in range(S):
        g = p2[:, t] @ p["w_ih"].T + h @ p["w_hh"].T + p["b_ih"] + p["b_hh"]
        i = jax.nn.sigmoid(g[:, 0 * H:1 * H])
        f = jax.nn.sigmoid(g[:, 1 * H:2 * H])
        gg = jnp.tanh(g[:, 2 * H:3 * H])
        o = jax.nn.sigmoid(g[:, 3 * H:4 * H])
        c = f * c + i * gg
        h = o * jnp.tanh(c)
    return h @ p["fc_w"].T + p["fc_b"]


if __name__ == "__main__":
    key = jax.random.PRNGKey(0)
    kx, kp = jax.random.split(key)
    B, S = 16, 8
    x = jax.random.normal(kx, (B, S, C_IN), jnp.float32)
    native = init_torch_params(kp)
    packed = pack_params(native)

    y = cnn_lstm_forward(x, packed)
    jax.block_until_ready(y)

    y_ref = ref_forward(x, native)
    assert y.shape == (B, OUT), y.shape
    # bf16 MXU operands (f32 accumulation) -> relaxed tolerance vs. the f32 ref.
    assert jnp.allclose(y, y_ref, rtol=5e-2, atol=5e-2), (
        float(jnp.max(jnp.abs(y - y_ref))),)
    print("KERNEL_OK")
</pallas_src>

<mosaic_0001>
module attributes {stable_mosaic.version = 11 : i64} {
  func.func @cnn_lstm_kernel(%arg0: i32, %arg1: memref<8x16x3xf32, #tpu.memory_space<vmem>>, %arg2: memref<6x32xf32, #tpu.memory_space<vmem>>, %arg3: memref<1x32xf32, #tpu.memory_space<vmem>>, %arg4: memref<32x128xbf16, #tpu.memory_space<vmem>>, %arg5: memref<1x64xf32, #tpu.memory_space<vmem>>, %arg6: memref<64x256xbf16, #tpu.memory_space<vmem>>, %arg7: memref<1x256xf32, #tpu.memory_space<vmem>>, %arg8: memref<64x256xbf16, #tpu.memory_space<vmem>>, %arg9: memref<64x128xbf16, #tpu.memory_space<vmem>>, %arg10: memref<1x128xf32, #tpu.memory_space<vmem>>, %arg11: memref<16x128xf32, #tpu.memory_space<vmem>>, %arg12: memref<8x16x256xf32, #tpu.memory_space<vmem>>) attributes {dimension_semantics = [#tpu.dimension_semantics<parallel>], iteration_bounds = array<i64: 1>, scalar_prefetch = 0 : i64, scratch_operands = 1 : i64, tpu.core_type = #tpu.core_type<tc>, window_params = [{transform_indices = @transform_0, window_bounds = array<i64: 8, 16, 3>}, {pipeline_mode = #tpu.pipeline_mode<synchronous>, transform_indices = @transform_1, window_bounds = array<i64: 6, 32>}, {pipeline_mode = #tpu.pipeline_mode<synchronous>, transform_indices = @transform_2, window_bounds = array<i64: 1, 32>}, {pipeline_mode = #tpu.pipeline_mode<synchronous>, transform_indices = @transform_3, window_bounds = array<i64: 32, 128>}, {pipeline_mode = #tpu.pipeline_mode<synchronous>, transform_indices = @transform_4, window_bounds = array<i64: 1, 64>}, {pipeline_mode = #tpu.pipeline_mode<synchronous>, transform_indices = @transform_5, window_bounds = array<i64: 64, 256>}, {pipeline_mode = #tpu.pipeline_mode<synchronous>, transform_indices = @transform_6, window_bounds = array<i64: 1, 256>}, {pipeline_mode = #tpu.pipeline_mode<synchronous>, transform_indices = @transform_7, window_bounds = array<i64: 64, 256>}, {pipeline_mode = #tpu.pipeline_mode<synchronous>, transform_indices = @transform_8, window_bounds = array<i64: 64, 128>}, {pipeline_mode = #tpu.pipeline_mode<synchronous>, transform_indices = @transform_9, window_bounds = array<i64: 1, 128>}, {transform_indices = @transform_10, window_bounds = array<i64: 16, 128>}]} {
    %c0 = arith.constant 0 : index
    %c0_0 = arith.constant 0 : index
    %c0_1 = arith.constant 0 : index
    %0 = vector.load %arg1[%c0, %c0_0, %c0_1] : memref<8x16x3xf32, #tpu.memory_space<vmem>>, vector<8x16x3xf32>
    %c0_2 = arith.constant 0 : index
    %c0_3 = arith.constant 0 : index
    %1 = vector.load %arg2[%c0_2, %c0_3] : memref<6x32xf32, #tpu.memory_space<vmem>>, vector<6x32xf32>
    %2 = vector.extract_strided_slice %0 {offsets = [0, 0, 0], sizes = [8, 16, 1], strides = [1, 1, 1]} : vector<8x16x3xf32> to vector<8x16x1xf32>
    %3 = vector.extract_strided_slice %1 {offsets = [0, 0], sizes = [1, 32], strides = [1, 1]} : vector<6x32xf32> to vector<1x32xf32>
    %4 = vector.shape_cast %3 : vector<1x32xf32> to vector<1x1x32xf32>
    %5 = vector.broadcast %2 : vector<8x16x1xf32> to vector<8x16x32xf32>
    %6 = vector.broadcast %4 : vector<1x1x32xf32> to vector<8x16x32xf32>
    %7 = arith.mulf %5, %6 : vector<8x16x32xf32>
    %8 = vector.extract_strided_slice %0 {offsets = [0, 0, 1], sizes = [8, 16, 1], strides = [1, 1, 1]} : vector<8x16x3xf32> to vector<8x16x1xf32>
    %9 = vector.extract_strided_slice %1 {offsets = [1, 0], sizes = [1, 32], strides = [1, 1]} : vector<6x32xf32> to vector<1x32xf32>
    %10 = vector.shape_cast %9 : vector<1x32xf32> to vector<1x1x32xf32>
    %11 = vector.broadcast %8 : vector<8x16x1xf32> to vector<8x16x32xf32>
    %12 = vector.broadcast %10 : vector<1x1x32xf32> to vector<8x16x32xf32>
    %13 = arith.mulf %11, %12 : vector<8x16x32xf32>
    %14 = arith.addf %7, %13 : vector<8x16x32xf32>
    %15 = vector.extract_strided_slice %0 {offsets = [0, 0, 2], sizes = [8, 16, 1], strides = [1, 1, 1]} : vector<8x16x3xf32> to vector<8x16x1xf32>
    %16 = vector.extract_strided_slice %1 {offsets = [2, 0], sizes = [1, 32], strides = [1, 1]} : vector<6x32xf32> to vector<1x32xf32>
    %17 = vector.shape_cast %16 : vector<1x32xf32> to vector<1x1x32xf32>
    %18 = vector.broadcast %15 : vector<8x16x1xf32> to vector<8x16x32xf32>
    %19 = vector.broadcast %17 : vector<1x1x32xf32> to vector<8x16x32xf32>
    %20 = arith.mulf %18, %19 : vector<8x16x32xf32>
    %21 = arith.addf %14, %20 : vector<8x16x32xf32>
    %22 = vector.extract_strided_slice %0 {offsets = [0, 0, 0], sizes = [8, 16, 1], strides = [1, 1, 1]} : vector<8x16x3xf32> to vector<8x16x1xf32>
    %23 = vector.extract_strided_slice %1 {offsets = [3, 0], sizes = [1, 32], strides = [1, 1]} : vector<6x32xf32> to vector<1x32xf32>
    %24 = vector.shape_cast %23 : vector<1x32xf32> to vector<1x1x32xf32>
    %25 = vector.broadcast %22 : vector<8x16x1xf32> to vector<8x16x32xf32>
    %26 = vector.broadcast %24 : vector<1x1x32xf32> to vector<8x16x32xf32>
    %27 = arith.mulf %25, %26 : vector<8x16x32xf32>
    %28 = vector.extract_strided_slice %0 {offsets = [0, 0, 1], sizes = [8, 16, 1], strides = [1, 1, 1]} : vector<8x16x3xf32> to vector<8x16x1xf32>
    %29 = vector.extract_strided_slice %1 {offsets = [4, 0], sizes = [1, 32], strides = [1, 1]} : vector<6x32xf32> to vector<1x32xf32>
    %30 = vector.shape_cast %29 : vector<1x32xf32> to vector<1x1x32xf32>
    %31 = vector.broadcast %28 : vector<8x16x1xf32> to vector<8x16x32xf32>
    %32 = vector.broadcast %30 : vector<1x1x32xf32> to vector<8x16x32xf32>
    %33 = arith.mulf %31, %32 : vector<8x16x32xf32>
    %34 = arith.addf %27, %33 : vector<8x16x32xf32>
    %35 = vector.extract_strided_slice %0 {offsets = [0, 0, 2], sizes = [8, 16, 1], strides = [1, 1, 1]} : vector<8x16x3xf32> to vector<8x16x1xf32>
    %36 = vector.extract_strided_slice %1 {offsets = [5, 0], sizes = [1, 32], strides = [1, 1]} : vector<6x32xf32> to vector<1x32xf32>
    %37 = vector.shape_cast %36 : vector<1x32xf32> to vector<1x1x32xf32>
    %38 = vector.broadcast %35 : vector<8x16x1xf32> to vector<8x16x32xf32>
    %39 = vector.broadcast %37 : vector<1x1x32xf32> to vector<8x16x32xf32>
    %40 = arith.mulf %38, %39 : vector<8x16x32xf32>
    %41 = arith.addf %34, %40 : vector<8x16x32xf32>
    %cst = arith.constant 0.000000e+00 : f32
    %42 = vector.broadcast %cst : f32 to vector<1x16x32xf32>
    %43 = tpu.concatenate %42, %21 in 0 : vector<1x16x32xf32>, vector<8x16x32xf32> -> vector<9x16x32xf32>
    %44 = tpu.concatenate %41, %42 in 0 : vector<8x16x32xf32>, vector<1x16x32xf32> -> vector<9x16x32xf32>
    %45 = arith.addf %43, %44 : vector<9x16x32xf32>
    %c0_4 = arith.constant 0 : index
    %c0_5 = arith.constant 0 : index
    %46 = vector.load %arg3[%c0_4, %c0_5] : memref<1x32xf32, #tpu.memory_space<vmem>>, vector<1x32xf32>
    %47 = vector.shape_cast %46 : vector<1x32xf32> to vector<1x1x32xf32>
    %48 = vector.broadcast %47 : vector<1x1x32xf32> to vector<9x16x32xf32>
    %49 = arith.addf %45, %48 : vector<9x16x32xf32>
    %cst_6 = arith.constant 0.000000e+00 : f32
    %50 = vector.broadcast %cst_6 : f32 to vector<9x16x32xf32>
    %51 = arith.maximumf %49, %50 : vector<9x16x32xf32>
    %52 = vector.extract_strided_slice %51 {offsets = [0, 0, 0], sizes = [8, 16, 32], strides = [1, 1, 1]} : vector<9x16x32xf32> to vector<8x16x32xf32>
    %53 = vector.extract_strided_slice %51 {offsets = [1, 0, 0], sizes = [8, 16, 32], strides = [1, 1, 1]} : vector<9x16x32xf32> to vector<8x16x32xf32>
    %54 = arith.maximumf %52, %53 : vector<8x16x32xf32>
    %55 = arith.truncf %54 : vector<8x16x32xf32> to vector<8x16x32xbf16>
    %56 = vector.shape_cast %55 : vector<8x16x32xbf16> to vector<128x32xbf16>
    %c0_7 = arith.constant 0 : index
    %c0_8 = arith.constant 0 : index
    %57 = vector.load %arg4[%c0_7, %c0_8] : memref<32x128xbf16, #tpu.memory_space<vmem>>, vector<32x128xbf16>
    %cst_9 = arith.constant dense<0.000000e+00> : vector<128x128xf32>
    %58 = tpu.matmul %56, %57, %cst_9 {dimension_numbers = #tpu.dot_dimension_numbers<[1], [0], [0], [1], [0, 0, 1, 1], [], []>} : vector<128x32xbf16>, vector<32x128xbf16>, vector<128x128xf32> -> vector<128x128xf32>
    %59 = vector.shape_cast %58 : vector<128x128xf32> to vector<8x16x128xf32>
    %cst_10 = arith.constant 0.000000e+00 : f32
    %60 = vector.broadcast %cst_10 : f32 to vector<1x16x64xf32>
    %61 = vector.extract_strided_slice %59 {offsets = [0, 0, 0], sizes = [8, 16, 64], strides = [1, 1, 1]} : vector<8x16x128xf32> to vector<8x16x64xf32>
    %62 = tpu.concatenate %60, %61 in 0 : vector<1x16x64xf32>, vector<8x16x64xf32> -> vector<9x16x64xf32>
    %63 = vector.extract_strided_slice %59 {offsets = [0, 0, 64], sizes = [8, 16, 64], strides = [1, 1, 1]} : vector<8x16x128xf32> to vector<8x16x64xf32>
    %64 = tpu.concatenate %63, %60 in 0 : vector<8x16x64xf32>, vector<1x16x64xf32> -> vector<9x16x64xf32>
    %65 = arith.addf %62, %64 : vector<9x16x64xf32>
    %c0_11 = arith.constant 0 : index
    %c0_12 = arith.constant 0 : index
    %66 = vector.load %arg5[%c0_11, %c0_12] : memref<1x64xf32, #tpu.memory_space<vmem>>, vector<1x64xf32>
    %67 = vector.shape_cast %66 : vector<1x64xf32> to vector<1x1x64xf32>
    %68 = vector.broadcast %67 : vector<1x1x64xf32> to vector<9x16x64xf32>
    %69 = arith.addf %65, %68 : vector<9x16x64xf32>
    %cst_13 = arith.constant 0.000000e+00 : f32
    %70 = vector.broadcast %cst_13 : f32 to vector<9x16x64xf32>
    %71 = arith.maximumf %69, %70 : vector<9x16x64xf32>
    %72 = vector.extract_strided_slice %71 {offsets = [0, 0, 0], sizes = [8, 16, 64], strides = [1, 1, 1]} : vector<9x16x64xf32> to vector<8x16x64xf32>
    %73 = vector.extract_strided_slice %71 {offsets = [1, 0, 0], sizes = [8, 16, 64], strides = [1, 1, 1]} : vector<9x16x64xf32> to vector<8x16x64xf32>
    %74 = arith.maximumf %72, %73 : vector<8x16x64xf32>
    %75 = arith.truncf %74 : vector<8x16x64xf32> to vector<8x16x64xbf16>
    %76 = vector.shape_cast %75 : vector<8x16x64xbf16> to vector<128x64xbf16>
    %c0_14 = arith.constant 0 : index
    %c0_15 = arith.constant 0 : index
    %77 = vector.load %arg6[%c0_14, %c0_15] : memref<64x256xbf16, #tpu.memory_space<vmem>>, vector<64x256xbf16>
    %cst_16 = arith.constant dense<0.000000e+00> : vector<128x256xf32>
    %78 = tpu.matmul %76, %77, %cst_16 {dimension_numbers = #tpu.dot_dimension_numbers<[1], [0], [0], [1], [0, 0, 1, 1], [], []>} : vector<128x64xbf16>, vector<64x256xbf16>, vector<128x256xf32> -> vector<128x256xf32>
    %c0_17 = arith.constant 0 : index
    %c0_18 = arith.constant 0 : index
    %79 = vector.load %arg7[%c0_17, %c0_18] : memref<1x256xf32, #tpu.memory_space<vmem>>, vector<1x256xf32>
    %80 = vector.broadcast %79 : vector<1x256xf32> to vector<128x256xf32>
    %81 = arith.addf %78, %80 : vector<128x256xf32>
    %82 = vector.shape_cast %81 : vector<128x256xf32> to vector<8x16x256xf32>
    %c0_19 = arith.constant 0 : index
    %c0_20 = arith.constant 0 : index
    %c0_21 = arith.constant 0 : index
    %83 = vector.load %arg12[%c0_19, %c0_20, %c0_21] : memref<8x16x256xf32, #tpu.memory_space<vmem>>, vector<8x16x256xf32>
    tpu.vector_store %arg12[%c0_19, %c0_20, %c0_21], %82 {strides = array<i32>} : memref<8x16x256xf32, #tpu.memory_space<vmem>>, vector<8x16x256xf32>,
    %c0_22 = arith.constant 0 : index
    %c0_23 = arith.constant 0 : index
    %84 = vector.load %arg8[%c0_22, %c0_23] : memref<64x256xbf16, #tpu.memory_space<vmem>>, vector<64x256xbf16>
    %cst_24 = arith.constant 0.000000e+00 : f32
    %85 = vector.broadcast %cst_24 : f32 to vector<16x64xf32>
    %cst_25 = arith.constant 0.000000e+00 : f32
    %86 = vector.broadcast %cst_25 : f32 to vector<16x64xf32>
    %c0_i32 = arith.constant 0 : i32
    %87 = arith.index_cast %c0_i32 : i32 to index
    %c0_26 = arith.constant 0 : index
    %c0_27 = arith.constant 0 : index
    %88 = vector.load %arg12[%87, %c0_26, %c0_27] : memref<8x16x256xf32, #tpu.memory_space<vmem>>, vector<1x16x256xf32>
    %89 = vector.shape_cast %88 : vector<1x16x256xf32> to vector<16x256xf32>
    %90 = arith.truncf %85 : vector<16x64xf32> to vector<16x64xbf16>
    %cst_28 = arith.constant dense<0.000000e+00> : vector<16x256xf32>
    %91 = tpu.matmul %90, %84, %cst_28 {dimension_numbers = #tpu.dot_dimension_numbers<[1], [0], [0], [1], [0, 0, 1, 1], [], []>} : vector<16x64xbf16>, vector<64x256xbf16>, vector<16x256xf32> -> vector<16x256xf32>
    %92 = arith.addf %89, %91 : vector<16x256xf32>
    %93 = vector.extract_strided_slice %92 {offsets = [0, 0], sizes = [16, 192], strides = [1, 1]} : vector<16x256xf32> to vector<16x192xf32>
    %94 = arith.negf %93 : vector<16x192xf32>
    %95 = math.exp %94 : vector<16x192xf32>
    %cst_29 = arith.constant 1.000000e+00 : f32
    %96 = vector.broadcast %cst_29 : f32 to vector<16x192xf32>
    %97 = arith.addf %96, %95 : vector<16x192xf32>
    %98 = arith.divf %96, %97 : vector<16x192xf32>
    %99 = vector.extract_strided_slice %98 {offsets = [0, 0], sizes = [16, 64], strides = [1, 1]} : vector<16x192xf32> to vector<16x64xf32>
    %100 = vector.extract_strided_slice %98 {offsets = [0, 64], sizes = [16, 64], strides = [1, 1]} : vector<16x192xf32> to vector<16x64xf32>
    %101 = vector.extract_strided_slice %98 {offsets = [0, 128], sizes = [16, 64], strides = [1, 1]} : vector<16x192xf32> to vector<16x64xf32>
    %102 = vector.extract_strided_slice %92 {offsets = [0, 192], sizes = [16, 64], strides = [1, 1]} : vector<16x256xf32> to vector<16x64xf32>
    %103 = math.tanh %102 : vector<16x64xf32>
    %104 = arith.mulf %100, %86 : vector<16x64xf32>
    %105 = arith.mulf %99, %103 : vector<16x64xf32>
    %106 = arith.addf %104, %105 : vector<16x64xf32>
    %107 = math.tanh %106 : vector<16x64xf32>
    %108 = arith.mulf %101, %107 : vector<16x64xf32>
    %c1_i32 = arith.constant 1 : i32
    %109 = arith.index_cast %c1_i32 : i32 to index
    %c0_30 = arith.constant 0 : index
    %c0_31 = arith.constant 0 : index
    %110 = vector.load %arg12[%109, %c0_30, %c0_31] : memref<8x16x256xf32, #tpu.memory_space<vmem>>, vector<1x16x256xf32>
    %111 = vector.shape_cast %110 : vector<1x16x256xf32> to vector<16x256xf32>
    %112 = arith.truncf %108 : vector<16x64xf32> to vector<16x64xbf16>
    %cst_32 = arith.constant dense<0.000000e+00> : vector<16x256xf32>
    %113 = tpu.matmul %112, %84, %cst_32 {dimension_numbers = #tpu.dot_dimension_numbers<[1], [0], [0], [1], [0, 0, 1, 1], [], []>} : vector<16x64xbf16>, vector<64x256xbf16>, vector<16x256xf32> -> vector<16x256xf32>
    %114 = arith.addf %111, %113 : vector<16x256xf32>
    %115 = vector.extract_strided_slice %114 {offsets = [0, 0], sizes = [16, 192], strides = [1, 1]} : vector<16x256xf32> to vector<16x192xf32>
    %116 = arith.negf %115 : vector<16x192xf32>
    %117 = math.exp %116 : vector<16x192xf32>
    %cst_33 = arith.constant 1.000000e+00 : f32
    %118 = vector.broadcast %cst_33 : f32 to vector<16x192xf32>
    %119 = arith.addf %118, %117 : vector<16x192xf32>
    %120 = arith.divf %118, %119 : vector<16x192xf32>
    %121 = vector.extract_strided_slice %120 {offsets = [0, 0], sizes = [16, 64], strides = [1, 1]} : vector<16x192xf32> to vector<16x64xf32>
    %122 = vector.extract_strided_slice %120 {offsets = [0, 64], sizes = [16, 64], strides = [1, 1]} : vector<16x192xf32> to vector<16x64xf32>
    %123 = vector.extract_strided_slice %120 {offsets = [0, 128], sizes = [16, 64], strides = [1, 1]} : vector<16x192xf32> to vector<16x64xf32>
    %124 = vector.extract_strided_slice %114 {offsets = [0, 192], sizes = [16, 64], strides = [1, 1]} : vector<16x256xf32> to vector<16x64xf32>
    %125 = math.tanh %124 : vector<16x64xf32>
    %126 = arith.mulf %122, %106 : vector<16x64xf32>
    %127 = arith.mulf %121, %125 : vector<16x64xf32>
    %128 = arith.addf %126, %127 : vector<16x64xf32>
    %129 = math.tanh %128 : vector<16x64xf32>
    %130 = arith.mulf %123, %129 : vector<16x64xf32>
    %c2_i32 = arith.constant 2 : i32
    %131 = arith.index_cast %c2_i32 : i32 to index
    %c0_34 = arith.constant 0 : index
    %c0_35 = arith.constant 0 : index
    %132 = vector.load %arg12[%131, %c0_34, %c0_35] : memref<8x16x256xf32, #tpu.memory_space<vmem>>, vector<1x16x256xf32>
    %133 = vector.shape_cast %132 : vector<1x16x256xf32> to vector<16x256xf32>
    %134 = arith.truncf %130 : vector<16x64xf32> to vector<16x64xbf16>
    %cst_36 = arith.constant dense<0.000000e+00> : vector<16x256xf32>
    %135 = tpu.matmul %134, %84, %cst_36 {dimension_numbers = #tpu.dot_dimension_numbers<[1], [0], [0], [1], [0, 0, 1, 1], [], []>} : vector<16x64xbf16>, vector<64x256xbf16>, vector<16x256xf32> -> vector<16x256xf32>
    %136 = arith.addf %133, %135 : vector<16x256xf32>
    %137 = vector.extract_strided_slice %136 {offsets = [0, 0], sizes = [16, 192], strides = [1, 1]} : vector<16x256xf32> to vector<16x192xf32>
    %138 = arith.negf %137 : vector<16x192xf32>
    %139 = math.exp %138 : vector<16x192xf32>
    %cst_37 = arith.constant 1.000000e+00 : f32
    %140 = vector.broadcast %cst_37 : f32 to vector<16x192xf32>
    %141 = arith.addf %140, %139 : vector<16x192xf32>
    %142 = arith.divf %140, %141 : vector<16x192xf32>
    %143 = vector.extract_strided_slice %142 {offsets = [0, 0], sizes = [16, 64], strides = [1, 1]} : vector<16x192xf32> to vector<16x64xf32>
    %144 = vector.extract_strided_slice %142 {offsets = [0, 64], sizes = [16, 64], strides = [1, 1]} : vector<16x192xf32> to vector<16x64xf32>
    %145 = vector.extract_strided_slice %142 {offsets = [0, 128], sizes = [16, 64], strides = [1, 1]} : vector<16x192xf32> to vector<16x64xf32>
    %146 = vector.extract_strided_slice %136 {offsets = [0, 192], sizes = [16, 64], strides = [1, 1]} : vector<16x256xf32> to vector<16x64xf32>
    %147 = math.tanh %146 : vector<16x64xf32>
    %148 = arith.mulf %144, %128 : vector<16x64xf32>
    %149 = arith.mulf %143, %147 : vector<16x64xf32>
    %150 = arith.addf %148, %149 : vector<16x64xf32>
    %151 = math.tanh %150 : vector<16x64xf32>
    %152 = arith.mulf %145, %151 : vector<16x64xf32>
    %c3_i32 = arith.constant 3 : i32
    %153 = arith.index_cast %c3_i32 : i32 to index
    %c0_38 = arith.constant 0 : index
    %c0_39 = arith.constant 0 : index
    %154 = vector.load %arg12[%153, %c0_38, %c0_39] : memref<8x16x256xf32, #tpu.memory_space<vmem>>, vector<1x16x256xf32>
    %155 = vector.shape_cast %154 : vector<1x16x256xf32> to vector<16x256xf32>
    %156 = arith.truncf %152 : vector<16x64xf32> to vector<16x64xbf16>
    %cst_40 = arith.constant dense<0.000000e+00> : vector<16x256xf32>
    %157 = tpu.matmul %156, %84, %cst_40 {dimension_numbers = #tpu.dot_dimension_numbers<[1], [0], [0], [1], [0, 0, 1, 1], [], []>} : vector<16x64xbf16>, vector<64x256xbf16>, vector<16x256xf32> -> vector<16x256xf32>
    %158 = arith.addf %155, %157 : vector<16x256xf32>
    %159 = vector.extract_strided_slice %158 {offsets = [0, 0], sizes = [16, 192], strides = [1, 1]} : vector<16x256xf32> to vector<16x192xf32>
    %160 = arith.negf %159 : vector<16x192xf32>
    %161 = math.exp %160 : vector<16x192xf32>
    %cst_41 = arith.constant 1.000000e+00 : f32
    %162 = vector.broadcast %cst_41 : f32 to vector<16x192xf32>
    %163 = arith.addf %162, %161 : vector<16x192xf32>
    %164 = arith.divf %162, %163 : vector<16x192xf32>
    %165 = vector.extract_strided_slice %164 {offsets = [0, 0], sizes = [16, 64], strides = [1, 1]} : vector<16x192xf32> to vector<16x64xf32>
    %166 = vector.extract_strided_slice %164 {offsets = [0, 64], sizes = [16, 64], strides = [1, 1]} : vector<16x192xf32> to vector<16x64xf32>
    %167 = vector.extract_strided_slice %164 {offsets = [0, 128], sizes = [16, 64], strides = [1, 1]} : vector<16x192xf32> to vector<16x64xf32>
    %168 = vector.extract_strided_slice %158 {offsets = [0, 192], sizes = [16, 64], strides = [1, 1]} : vector<16x256xf32> to vector<16x64xf32>
    %169 = math.tanh %168 : vector<16x64xf32>
    %170 = arith.mulf %166, %150 : vector<16x64xf32>
    %171 = arith.mulf %165, %169 : vector<16x64xf32>
    %172 = arith.addf %170, %171 : vector<16x64xf32>
    %173 = math.tanh %172 : vector<16x64xf32>
    %174 = arith.mulf %167, %173 : vector<16x64xf32>
    %c4_i32 = arith.constant 4 : i32
    %175 = arith.index_cast %c4_i32 : i32 to index
    %c0_42 = arith.constant 0 : index
    %c0_43 = arith.constant 0 : index
    %176 = vector.load %arg12[%175, %c0_42, %c0_43] : memref<8x16x256xf32, #tpu.memory_space<vmem>>, vector<1x16x256xf32>
    %177 = vector.shape_cast %176 : vector<1x16x256xf32> to vector<16x256xf32>
    %178 = arith.truncf %174 : vector<16x64xf32> to vector<16x64xbf16>
    %cst_44 = arith.constant dense<0.000000e+00> : vector<16x256xf32>
    %179 = tpu.matmul %178, %84, %cst_44 {dimension_numbers = #tpu.dot_dimension_numbers<[1], [0], [0], [1], [0, 0, 1, 1], [], []>} : vector<16x64xbf16>, vector<64x256xbf16>, vector<16x256xf32> -> vector<16x256xf32>
    %180 = arith.addf %177, %179 : vector<16x256xf32>
    %181 = vector.extract_strided_slice %180 {offsets = [0, 0], sizes = [16, 192], strides = [1, 1]} : vector<16x256xf32> to vector<16x192xf32>
    %182 = arith.negf %181 : vector<16x192xf32>
    %183 = math.exp %182 : vector<16x192xf32>
    %cst_45 = arith.constant 1.000000e+00 : f32
    %184 = vector.broadcast %cst_45 : f32 to vector<16x192xf32>
    %185 = arith.addf %184, %183 : vector<16x192xf32>
    %186 = arith.divf %184, %185 : vector<16x192xf32>
    %187 = vector.extract_strided_slice %186 {offsets = [0, 0], sizes = [16, 64], strides = [1, 1]} : vector<16x192xf32> to vector<16x64xf32>
    %188 = vector.extract_strided_slice %186 {offsets = [0, 64], sizes = [16, 64], strides = [1, 1]} : vector<16x192xf32> to vector<16x64xf32>
    %189 = vector.extract_strided_slice %186 {offsets = [0, 128], sizes = [16, 64], strides = [1, 1]} : vector<16x192xf32> to vector<16x64xf32>
    %190 = vector.extract_strided_slice %180 {offsets = [0, 192], sizes = [16, 64], strides = [1, 1]} : vector<16x256xf32> to vector<16x64xf32>
    %191 = math.tanh %190 : vector<16x64xf32>
    %192 = arith.mulf %188, %172 : vector<16x64xf32>
    %193 = arith.mulf %187, %191 : vector<16x64xf32>
    %194 = arith.addf %192, %193 : vector<16x64xf32>
    %195 = math.tanh %194 : vector<16x64xf32>
    %196 = arith.mulf %189, %195 : vector<16x64xf32>
    %c5_i32 = arith.constant 5 : i32
    %197 = arith.index_cast %c5_i32 : i32 to index
    %c0_46 = arith.constant 0 : index
    %c0_47 = arith.constant 0 : index
    %198 = vector.load %arg12[%197, %c0_46, %c0_47] : memref<8x16x256xf32, #tpu.memory_space<vmem>>, vector<1x16x256xf32>
    %199 = vector.shape_cast %198 : vector<1x16x256xf32> to vector<16x256xf32>
    %200 = arith.truncf %196 : vector<16x64xf32> to vector<16x64xbf16>
    %cst_48 = arith.constant dense<0.000000e+00> : vector<16x256xf32>
    %201 = tpu.matmul %200, %84, %cst_48 {dimension_numbers = #tpu.dot_dimension_numbers<[1], [0], [0], [1], [0, 0, 1, 1], [], []>} : vector<16x64xbf16>, vector<64x256xbf16>, vector<16x256xf32> -> vector<16x256xf32>
    %202 = arith.addf %199, %201 : vector<16x256xf32>
    %203 = vector.extract_strided_slice %202 {offsets = [0, 0], sizes = [16, 192], strides = [1, 1]} : vector<16x256xf32> to vector<16x192xf32>
    %204 = arith.negf %203 : vector<16x192xf32>
    %205 = math.exp %204 : vector<16x192xf32>
    %cst_49 = arith.constant 1.000000e+00 : f32
    %206 = vector.broadcast %cst_49 : f32 to vector<16x192xf32>
    %207 = arith.addf %206, %205 : vector<16x192xf32>
    %208 = arith.divf %206, %207 : vector<16x192xf32>
    %209 = vector.extract_strided_slice %208 {offsets = [0, 0], sizes = [16, 64], strides = [1, 1]} : vector<16x192xf32> to vector<16x64xf32>
    %210 = vector.extract_strided_slice %208 {offsets = [0, 64], sizes = [16, 64], strides = [1, 1]} : vector<16x192xf32> to vector<16x64xf32>
    %211 = vector.extract_strided_slice %208 {offsets = [0, 128], sizes = [16, 64], strides = [1, 1]} : vector<16x192xf32> to vector<16x64xf32>
    %212 = vector.extract_strided_slice %202 {offsets = [0, 192], sizes = [16, 64], strides = [1, 1]} : vector<16x256xf32> to vector<16x64xf32>
    %213 = math.tanh %212 : vector<16x64xf32>
    %214 = arith.mulf %210, %194 : vector<16x64xf32>
    %215 = arith.mulf %209, %213 : vector<16x64xf32>
    %216 = arith.addf %214, %215 : vector<16x64xf32>
    %217 = math.tanh %216 : vector<16x64xf32>
    %218 = arith.mulf %211, %217 : vector<16x64xf32>
    %c6_i32 = arith.constant 6 : i32
    %219 = arith.index_cast %c6_i32 : i32 to index
    %c0_50 = arith.constant 0 : index
    %c0_51 = arith.constant 0 : index
    %220 = vector.load %arg12[%219, %c0_50, %c0_51] : memref<8x16x256xf32, #tpu.memory_space<vmem>>, vector<1x16x256xf32>
    %221 = vector.shape_cast %220 : vector<1x16x256xf32> to vector<16x256xf32>
    %222 = arith.truncf %218 : vector<16x64xf32> to vector<16x64xbf16>
    %cst_52 = arith.constant dense<0.000000e+00> : vector<16x256xf32>
    %223 = tpu.matmul %222, %84, %cst_52 {dimension_numbers = #tpu.dot_dimension_numbers<[1], [0], [0], [1], [0, 0, 1, 1], [], []>} : vector<16x64xbf16>, vector<64x256xbf16>, vector<16x256xf32> -> vector<16x256xf32>
    %224 = arith.addf %221, %223 : vector<16x256xf32>
    %225 = vector.extract_strided_slice %224 {offsets = [0, 0], sizes = [16, 192], strides = [1, 1]} : vector<16x256xf32> to vector<16x192xf32>
    %226 = arith.negf %225 : vector<16x192xf32>
    %227 = math.exp %226 : vector<16x192xf32>
    %cst_53 = arith.constant 1.000000e+00 : f32
    %228 = vector.broadcast %cst_53 : f32 to vector<16x192xf32>
    %229 = arith.addf %228, %227 : vector<16x192xf32>
    %230 = arith.divf %228, %229 : vector<16x192xf32>
    %231 = vector.extract_strided_slice %230 {offsets = [0, 0], sizes = [16, 64], strides = [1, 1]} : vector<16x192xf32> to vector<16x64xf32>
    %232 = vector.extract_strided_slice %230 {offsets = [0, 64], sizes = [16, 64], strides = [1, 1]} : vector<16x192xf32> to vector<16x64xf32>
    %233 = vector.extract_strided_slice %230 {offsets = [0, 128], sizes = [16, 64], strides = [1, 1]} : vector<16x192xf32> to vector<16x64xf32>
    %234 = vector.extract_strided_slice %224 {offsets = [0, 192], sizes = [16, 64], strides = [1, 1]} : vector<16x256xf32> to vector<16x64xf32>
    %235 = math.tanh %234 : vector<16x64xf32>
    %236 = arith.mulf %232, %216 : vector<16x64xf32>
    %237 = arith.mulf %231, %235 : vector<16x64xf32>
    %238 = arith.addf %236, %237 : vector<16x64xf32>
    %239 = math.tanh %238 : vector<16x64xf32>
    %240 = arith.mulf %233, %239 : vector<16x64xf32>
    %c7_i32 = arith.constant 7 : i32
    %241 = arith.index_cast %c7_i32 : i32 to index
    %c0_54 = arith.constant 0 : index
    %c0_55 = arith.constant 0 : index
    %242 = vector.load %arg12[%241, %c0_54, %c0_55] : memref<8x16x256xf32, #tpu.memory_space<vmem>>, vector<1x16x256xf32>
    %243 = vector.shape_cast %242 : vector<1x16x256xf32> to vector<16x256xf32>
    %244 = arith.truncf %240 : vector<16x64xf32> to vector<16x64xbf16>
    %cst_56 = arith.constant dense<0.000000e+00> : vector<16x256xf32>
    %245 = tpu.matmul %244, %84, %cst_56 {dimension_numbers = #tpu.dot_dimension_numbers<[1], [0], [0], [1], [0, 0, 1, 1], [], []>} : vector<16x64xbf16>, vector<64x256xbf16>, vector<16x256xf32> -> vector<16x256xf32>
    %246 = arith.addf %243, %245 : vector<16x256xf32>
    %247 = vector.extract_strided_slice %246 {offsets = [0, 0], sizes = [16, 192], strides = [1, 1]} : vector<16x256xf32> to vector<16x192xf32>
    %248 = arith.negf %247 : vector<16x192xf32>
    %249 = math.exp %248 : vector<16x192xf32>
    %cst_57 = arith.constant 1.000000e+00 : f32
    %250 = vector.broadcast %cst_57 : f32 to vector<16x192xf32>
    %251 = arith.addf %250, %249 : vector<16x192xf32>
    %252 = arith.divf %250, %251 : vector<16x192xf32>
    %253 = vector.extract_strided_slice %252 {offsets = [0, 0], sizes = [16, 64], strides = [1, 1]} : vector<16x192xf32> to vector<16x64xf32>
    %254 = vector.extract_strided_slice %252 {offsets = [0, 64], sizes = [16, 64], strides = [1, 1]} : vector<16x192xf32> to vector<16x64xf32>
    %255 = vector.extract_strided_slice %252 {offsets = [0, 128], sizes = [16, 64], strides = [1, 1]} : vector<16x192xf32> to vector<16x64xf32>
    %256 = vector.extract_strided_slice %246 {offsets = [0, 192], sizes = [16, 64], strides = [1, 1]} : vector<16x256xf32> to vector<16x64xf32>
    %257 = math.tanh %256 : vector<16x64xf32>
    %258 = arith.mulf %254, %238 : vector<16x64xf32>
    %259 = arith.mulf %253, %257 : vector<16x64xf32>
    %260 = arith.addf %258, %259 : vector<16x64xf32>
    %261 = math.tanh %260 : vector<16x64xf32>
    %262 = arith.mulf %255, %261 : vector<16x64xf32>
    %c8_i32 = arith.constant 8 : i32
    %263 = arith.truncf %262 : vector<16x64xf32> to vector<16x64xbf16>
    %c0_58 = arith.constant 0 : index
    %c0_59 = arith.constant 0 : index
    %264 = vector.load %arg9[%c0_58, %c0_59] : memref<64x128xbf16, #tpu.memory_space<vmem>>, vector<64x128xbf16>
    %cst_60 = arith.constant dense<0.000000e+00> : vector<16x128xf32>
    %265 = tpu.matmul %263, %264, %cst_60 {dimension_numbers = #tpu.dot_dimension_numbers<[1], [0], [0], [1], [0, 0, 1, 1], [], []>} : vector<16x64xbf16>, vector<64x128xbf16>, vector<16x128xf32> -> vector<16x128xf32>
    %c0_61 = arith.constant 0 : index
    %c0_62 = arith.constant 0 : index
    %266 = vector.load %arg10[%c0_61, %c0_62] : memref<1x128xf32, #tpu.memory_space<vmem>>, vector<1x128xf32>
    %267 = vector.broadcast %266 : vector<1x128xf32> to vector<16x128xf32>
    %268 = arith.addf %265, %267 : vector<16x128xf32>
    %c0_63 = arith.constant 0 : index
    %c0_64 = arith.constant 0 : index
    %269 = vector.load %arg11[%c0_63, %c0_64] : memref<16x128xf32, #tpu.memory_space<vmem>>, vector<16x128xf32>
    tpu.vector_store %arg11[%c0_63, %c0_64], %268 {strides = array<i32>} : memref<16x128xf32, #tpu.memory_space<vmem>>, vector<16x128xf32>,
    return
  }
  func.func @transform_0(%arg0: i32) -> (i32, i32, i32) {
    %c0_i32 = arith.constant 0 : i32
    %c0_i32_0 = arith.constant 0 : i32
    %c0_i32_1 = arith.constant 0 : i32
    return %c0_i32, %arg0, %c0_i32_0 : i32, i32, i32
  }
  func.func @transform_1(%arg0: i32) -> (i32, i32) {
    %c0_i32 = arith.constant 0 : i32
    %c0_i32_0 = arith.constant 0 : i32
    %c0_i32_1 = arith.constant 0 : i32
    return %c0_i32, %c0_i32_0 : i32, i32
  }
  func.func @transform_2(%arg0: i32) -> (i32, i32) {
    %c0_i32 = arith.constant 0 : i32
    %c0_i32_0 = arith.constant 0 : i32
    %c0_i32_1 = arith.constant 0 : i32
    return %c0_i32, %c0_i32_0 : i32, i32
  }
  func.func @transform_3(%arg0: i32) -> (i32, i32) {
    %c0_i32 = arith.constant 0 : i32
    %c0_i32_0 = arith.constant 0 : i32
    %c0_i32_1 = arith.constant 0 : i32
    return %c0_i32, %c0_i32_0 : i32, i32
  }
  func.func @transform_4(%arg0: i32) -> (i32, i32) {
    %c0_i32 = arith.constant 0 : i32
    %c0_i32_0 = arith.constant 0 : i32
    %c0_i32_1 = arith.constant 0 : i32
    return %c0_i32, %c0_i32_0 : i32, i32
  }
  func.func @transform_5(%arg0: i32) -> (i32, i32) {
    %c0_i32 = arith.constant 0 : i32
    %c0_i32_0 = arith.constant 0 : i32
    %c0_i32_1 = arith.constant 0 : i32
    return %c0_i32, %c0_i32_0 : i32, i32
  }
  func.func @transform_6(%arg0: i32) -> (i32, i32) {
    %c0_i32 = arith.constant 0 : i32
    %c0_i32_0 = arith.constant 0 : i32
    %c0_i32_1 = arith.constant 0 : i32
    return %c0_i32, %c0_i32_0 : i32, i32
  }
  func.func @transform_7(%arg0: i32) -> (i32, i32) {
    %c0_i32 = arith.constant 0 : i32
    %c0_i32_0 = arith.constant 0 : i32
    %c0_i32_1 = arith.constant 0 : i32
    return %c0_i32, %c0_i32_0 : i32, i32
  }
  func.func @transform_8(%arg0: i32) -> (i32, i32) {
    %c0_i32 = arith.constant 0 : i32
    %c0_i32_0 = arith.constant 0 : i32
    %c0_i32_1 = arith.constant 0 : i32
    return %c0_i32, %c0_i32_0 : i32, i32
  }
  func.func @transform_9(%arg0: i32) -> (i32, i32) {
    %c0_i32 = arith.constant 0 : i32
    %c0_i32_0 = arith.constant 0 : i32
    %c0_i32_1 = arith.constant 0 : i32
    return %c0_i32, %c0_i32_0 : i32, i32
  }
  func.func @transform_10(%arg0: i32) -> (i32, i32) {
    %c0_i32 = arith.constant 0 : i32
    %c0_i32_0 = arith.constant 0 : i32
    return %arg0, %c0_i32 : i32, i32
  }
}

</mosaic_0001>

<llo_original>
// kernel: tpu_custom_call.1
$region0: #{tpu_custom_call.1}
  #allocation0 [shape = 'u32[]', space=smem, size = 0x4, offset = 0x4, fixed_abs, tag = 'smem constant byte address 0x4 - core index']
  #allocation1 [shape = 'u32[72,128]{1,0:T(1,128)}', space=vmem, size = 0x9000, scoped, tag = 'internal scratch']
  #allocation2 [shape = 'f32[8,16,256]{2,1,0:T(8,128)}', space=vmem, size = 0x20000, scoped, tag = 'scratch operand']
  %s0 = inlined_call_operand.vmem [shape: f32[8,16,3], index: 0, kind: input, shape index: {}]
  %s1 = inlined_call_operand.vmem [shape: f32[6,32], index: 1, kind: input, shape index: {}]
  %s2 = inlined_call_operand.vmem [shape: f32[1,32], index: 2, kind: input, shape index: {}]
  %s3 = inlined_call_operand.vmem [shape: bf16[32,128], index: 3, kind: input, shape index: {}]
  %s4 = inlined_call_operand.hbm [shape: f32[1,64], index: 4, kind: input, shape index: {}]
  %s5 = inlined_call_operand.vmem [shape: bf16[64,256], index: 5, kind: input, shape index: {}]
  %s6 = inlined_call_operand.vmem [shape: f32[1,256], index: 6, kind: input, shape index: {}]
  %s7 = inlined_call_operand.vmem [shape: bf16[64,256], index: 7, kind: input, shape index: {}]
  %s8 = inlined_call_operand.hbm [shape: bf16[64,128], index: 8, kind: input, shape index: {}]
  %s9 = inlined_call_operand.vmem [shape: f32[1,128], index: 9, kind: input, shape index: {}]
  %s10 = inlined_call_operand.hbm [shape: f32[16,128], index: 10, kind: output, shape index: {}]
  %s11 = sld [smem:[#allocation0]]
  $region58: #{tpu_custom_call.1} parent=0
    _
  %s13 = ssub.s32 1, %s11
  %s14 = scalar_select 0, %s13, %s11
  $region1: #{tpu_custom_call.1} parent=0
    #allocation3 [shape = 'u8[512]{0}', space=vmem, size = 0x400, scoped, tag = 'input window, operand 4, single buffered']
    #allocation4 [shape = 's32[1]{0}', space=sflag, size = 0x4, scoped, tag = 'scoped memory for tpu_custom_call.1']
    #allocation5 [shape = 's32[1]{0}', space=sflag, size = 0x4, scoped, tag = 'scoped memory for tpu_custom_call.1']
    #allocation6 [shape = 'u8[16384]{0}', space=vmem, size = 0x4000, scoped, tag = 'input window, operand 8, single buffered']
    #allocation7 [shape = 's32[1]{0}', space=sflag, size = 0x4, scoped, tag = 'scoped memory for tpu_custom_call.1']
    #allocation8 [shape = 'u8[8192]{0}', space=vmem, size = 0x2000, scoped, tag = 'output window, operand 0, single buffered']
    %15 = vsyncpa [#allocation4], 0
    %16 = vsyncpa [#allocation7], 0
    %17 = vsyncpa [#allocation5], 0
    // Predicated region
    $region2: #{tpu_custom_call.1} parent=1 // pred_check
      _
    $region3: #{tpu_custom_call.1} parent=1 // pred_check_branch
      %19 = sbr.rel (0) target = $region5
    $region4: #{tpu_custom_call.1} parent=1 // pred_region
      _
    $region5: #{tpu_custom_call.1} parent=1 // pred_fallthru
      _
    // Predicated region
    $region6: #{tpu_custom_call.1} parent=1 // pred_check
      _
    $region7: #{tpu_custom_call.1} parent=1 // pred_check_branch
      %21 = sbr.rel (0) target = $region9
    $region8: #{tpu_custom_call.1} parent=1 // pred_region
      _
    $region9: #{tpu_custom_call.1} parent=1 // pred_fallthru
      _
    // Predicated region
    $region10: #{tpu_custom_call.1} parent=1 // pred_check
      _
    $region11: #{tpu_custom_call.1} parent=1 // pred_check_branch
      %23 = sbr.rel (0) target = $region13
    $region12: #{tpu_custom_call.1} parent=1 // pred_region
      _
    $region13: #{tpu_custom_call.1} parent=1 // pred_fallthru
      _
    // Predicated region
    $region14: #{tpu_custom_call.1} parent=1 // pred_check
      _
    $region15: #{tpu_custom_call.1} parent=1 // pred_check_branch
      %25 = sbr.rel (0) target = $region17
    $region16: #{tpu_custom_call.1} parent=1 // pred_region
      _
    $region17: #{tpu_custom_call.1} parent=1 // pred_fallthru
      _
    // Predicated region
    $region18: #{tpu_custom_call.1} parent=1 // pred_check
      _
    $region19: #{tpu_custom_call.1} parent=1 // pred_check_branch
      %27 = sbr.rel (0) target = $region21
    $region20: #{tpu_custom_call.1} parent=1 // pred_region
      %29 = vsyncadd [#allocation4], 0
      %s31 = sshll.u32 %s4, 4
      %s32 = int_to_ptr.hbm [resolvable:$true] %s31
      %s33 = sshll.u32 [#allocation3], 4
      %s34 = int_to_ptr.vmem [resolvable:$true] %s33
      %36 = dma.hbm_to_vmem [thread:$0]  %s32, 16, %s34, [#allocation4]
    $region21: #{tpu_custom_call.1} parent=1 // pred_fallthru
      _
    // Predicated region
    $region22: #{tpu_custom_call.1} parent=1 // pred_check
      _
    $region23: #{tpu_custom_call.1} parent=1 // pred_check_branch
      %38 = sbr.rel (0) target = $region25
    $region24: #{tpu_custom_call.1} parent=1 // pred_region
      _
    $region25: #{tpu_custom_call.1} parent=1 // pred_fallthru
      _
    // Predicated region
    $region26: #{tpu_custom_call.1} parent=1 // pred_check
      _
    $region27: #{tpu_custom_call.1} parent=1 // pred_check_branch
      %40 = sbr.rel (0) target = $region29
    $region28: #{tpu_custom_call.1} parent=1 // pred_region
      _
    $region29: #{tpu_custom_call.1} parent=1 // pred_fallthru
      _
    // Predicated region
    $region30: #{tpu_custom_call.1} parent=1 // pred_check
      _
    $region31: #{tpu_custom_call.1} parent=1 // pred_check_branch
      %42 = sbr.rel (0) target = $region33
    $region32: #{tpu_custom_call.1} parent=1 // pred_region
      _
    $region33: #{tpu_custom_call.1} parent=1 // pred_fallthru
      _
    // Predicated region
    $region34: #{tpu_custom_call.1} parent=1 // pred_check
      _
    $region35: #{tpu_custom_call.1} parent=1 // pred_check_branch
      %44 = sbr.rel (0) target = $region37
    $region36: #{tpu_custom_call.1} parent=1 // pred_region
      %46 = vsyncadd [#allocation7], 0
      %s47 = sshll.u32 %s8, 4
      %s48 = int_to_ptr.hbm [resolvable:$true] %s47
      %s49 = sshll.u32 [#allocation6], 4
      %s50 = int_to_ptr.vmem [resolvable:$true] %s49
      %55 = dma.hbm_to_vmem [thread:$0]  %s48, 512, %s50, [#allocation7], 64, 64, 4
    $region37: #{tpu_custom_call.1} parent=1 // pred_fallthru
      _
    // Predicated region
    $region38: #{tpu_custom_call.1} parent=1 // pred_check
      _
    $region39: #{tpu_custom_call.1} parent=1 // pred_check_branch
      %57 = sbr.rel (0) target = $region41
    $region40: #{tpu_custom_call.1} parent=1 // pred_region
      _
    $region41: #{tpu_custom_call.1} parent=1 // pred_fallthru
      _
    // Predicated region
    $region42: #{tpu_custom_call.1} parent=1 // pred_check
      _
    $region43: #{tpu_custom_call.1} parent=1 // pred_check_branch
      %59 = sbr.rel (0) target = $region45
    $region44: #{tpu_custom_call.1} parent=1 // pred_region
      %61 = dma.done [#allocation4], 16
    $region45: #{tpu_custom_call.1} parent=1 // pred_fallthru
      _
    // Predicated region
    $region46: #{tpu_custom_call.1} parent=1 // pred_check
      _
    $region47: #{tpu_custom_call.1} parent=1 // pred_check_branch
      %63 = sbr.rel (0) target = $region49
    $region48: #{tpu_custom_call.1} parent=1 // pred_region
      %65 = dma.done [#allocation7], 512
    $region49: #{tpu_custom_call.1} parent=1 // pred_fallthru
      _
    %v67 = vld [vmem:[%s0] sm:$0xff]
    %v68 = vld [vmem:[%s0 + $0x8] sm:$0xff]
    %v69 = vld [vmem:[%s0 + $0x10] sm:$0xff]
    %v70 = vld [vmem:[%s0 + $0x18] sm:$0xff]
    %v71 = vld [vmem:[%s0 + $0x20] sm:$0xff]
    %v72 = vld [vmem:[%s0 + $0x28] sm:$0xff]
    %v73 = vld [vmem:[%s0 + $0x30] sm:$0xff]
    %v74 = vld [vmem:[%s0 + $0x38] sm:$0xff]
    %v75 = vld [vmem:[%s0 + $0x40] sm:$0xff]
    %v76 = vld [vmem:[%s0 + $0x48] sm:$0xff]
    %v77 = vld [vmem:[%s0 + $0x50] sm:$0xff]
    %v78 = vld [vmem:[%s0 + $0x58] sm:$0xff]
    %v79 = vld [vmem:[%s0 + $0x60] sm:$0xff]
    %v80 = vld [vmem:[%s0 + $0x68] sm:$0xff]
    %v81 = vld [vmem:[%s0 + $0x70] sm:$0xff]
    %v82 = vld [vmem:[%s0 + $0x78] sm:$0xff]
    %v83 = vld [vmem:[%s1] sm:$0x3f]
    %85 = vset.pattern.permute.xlu0 0
    %86 = vperm.xlu0 %85, %v67
    %v87 = vpop.permute.xlu0 %86
    %90 = vset.pattern.permute.xlu0 0
    %91 = vperm.xlu0 %90, %v68
    %v92 = vpop.permute.xlu0 %91
    %95 = vset.pattern.permute.xlu0 0
    %96 = vperm.xlu0 %95, %v69
    %v97 = vpop.permute.xlu0 %96
    %100 = vset.pattern.permute.xlu0 0
    %101 = vperm.xlu0 %100, %v70
    %v102 = vpop.permute.xlu0 %101
    %105 = vset.pattern.permute.xlu0 0
    %106 = vperm.xlu0 %105, %v71
    %v107 = vpop.permute.xlu0 %106
    %110 = vset.pattern.permute.xlu0 0
    %111 = vperm.xlu0 %110, %v72
    %v112 = vpop.permute.xlu0 %111
    %115 = vset.pattern.permute.xlu0 0
    %116 = vperm.xlu0 %115, %v73
    %v117 = vpop.permute.xlu0 %116
    %120 = vset.pattern.permute.xlu0 0
    %121 = vperm.xlu0 %120, %v74
    %v122 = vpop.permute.xlu0 %121
    %125 = vset.pattern.permute.xlu0 0
    %126 = vperm.xlu0 %125, %v75
    %v127 = vpop.permute.xlu0 %126
    %130 = vset.pattern.permute.xlu0 0
    %131 = vperm.xlu0 %130, %v76
    %v132 = vpop.permute.xlu0 %131
    %135 = vset.pattern.permute.xlu0 0
    %136 = vperm.xlu0 %135, %v77
    %v137 = vpop.permute.xlu0 %136
    %140 = vset.pattern.permute.xlu0 0
    %141 = vperm.xlu0 %140, %v78
    %v142 = vpop.permute.xlu0 %141
    %145 = vset.pattern.permute.xlu0 0
    %146 = vperm.xlu0 %145, %v79
    %v147 = vpop.permute.xlu0 %146
    %150 = vset.pattern.permute.xlu0 0
    %151 = vperm.xlu0 %150, %v80
    %v152 = vpop.permute.xlu0 %151
    %155 = vset.pattern.permute.xlu0 0
    %156 = vperm.xlu0 %155, %v81
    %v157 = vpop.permute.xlu0 %156
    %160 = vset.pattern.permute.xlu0 0
    %161 = vperm.xlu0 %160, %v82
    %v162 = vpop.permute.xlu0 %161
    %v164 = vperm.slane %v83, 0
    %v165 = vmul.f32 %v87, %v164
    %v166 = vmul.f32 %v92, %v164
    %v167 = vmul.f32 %v97, %v164
    %v168 = vmul.f32 %v102, %v164
    %v169 = vmul.f32 %v107, %v164
    %v170 = vmul.f32 %v112, %v164
    %v171 = vmul.f32 %v117, %v164
    %v172 = vmul.f32 %v122, %v164
    %v173 = vmul.f32 %v127, %v164
    %v174 = vmul.f32 %v132, %v164
    %v175 = vmul.f32 %v137, %v164
    %v176 = vmul.f32 %v142, %v164
    %v177 = vmul.f32 %v147, %v164
    %v178 = vmul.f32 %v152, %v164
    %v179 = vmul.f32 %v157, %v164
    %v180 = vmul.f32 %v162, %v164
    %181 = vset.pattern.permute.xlu0 1
    %182 = vperm.xlu0 %181, %v67
    %v183 = vpop.permute.xlu0 %182
    %185 = vset.pattern.permute.xlu0 1
    %186 = vperm.xlu0 %185, %v68
    %v187 = vpop.permute.xlu0 %186
    %189 = vset.pattern.permute.xlu0 1
    %190 = vperm.xlu0 %189, %v69
    %v191 = vpop.permute.xlu0 %190
    %193 = vset.pattern.permute.xlu0 1
    %194 = vperm.xlu0 %193, %v70
    %v195 = vpop.permute.xlu0 %194
    %197 = vset.pattern.permute.xlu0 1
    %198 = vperm.xlu0 %197, %v71
    %v199 = vpop.permute.xlu0 %198
    %201 = vset.pattern.permute.xlu0 1
    %202 = vperm.xlu0 %201, %v72
    %v203 = vpop.permute.xlu0 %202
    %205 = vset.pattern.permute.xlu0 1
    %206 = vperm.xlu0 %205, %v73
    %v207 = vpop.permute.xlu0 %206
    %209 = vset.pattern.permute.xlu0 1
    %210 = vperm.xlu0 %209, %v74
    %v211 = vpop.permute.xlu0 %210
    %213 = vset.pattern.permute.xlu0 1
    %214 = vperm.xlu0 %213, %v75
    %v215 = vpop.permute.xlu0 %214
    %217 = vset.pattern.permute.xlu0 1
    %218 = vperm.xlu0 %217, %v76
    %v219 = vpop.permute.xlu0 %218
    %221 = vset.pattern.permute.xlu0 1
    %222 = vperm.xlu0 %221, %v77
    %v223 = vpop.permute.xlu0 %222
    %225 = vset.pattern.permute.xlu0 1
    %226 = vperm.xlu0 %225, %v78
    %v227 = vpop.permute.xlu0 %226
    %229 = vset.pattern.permute.xlu0 1
    %230 = vperm.xlu0 %229, %v79
    %v231 = vpop.permute.xlu0 %230
    %233 = vset.pattern.permute.xlu0 1
    %234 = vperm.xlu0 %233, %v80
    %v235 = vpop.permute.xlu0 %234
    %237 = vset.pattern.permute.xlu0 1
    %238 = vperm.xlu0 %237, %v81
    %v239 = vpop.permute.xlu0 %238
    %241 = vset.pattern.permute.xlu0 1
    %242 = vperm.xlu0 %241, %v82
    %v243 = vpop.permute.xlu0 %242
    %v245 = vperm.slane %v83, 1
    %v246 = vmul.f32 %v183, %v245
    %v247 = vmul.f32 %v187, %v245
    %v248 = vmul.f32 %v191, %v245
    %v249 = vmul.f32 %v195, %v245
    %v250 = vmul.f32 %v199, %v245
    %v251 = vmul.f32 %v203, %v245
    %v252 = vmul.f32 %v207, %v245
    %v253 = vmul.f32 %v211, %v245
    %v254 = vmul.f32 %v215, %v245
    %v255 = vmul.f32 %v219, %v245
    %v256 = vmul.f32 %v223, %v245
    %v257 = vmul.f32 %v227, %v245
    %v258 = vmul.f32 %v231, %v245
    %v259 = vmul.f32 %v235, %v245
    %v260 = vmul.f32 %v239, %v245
    %v261 = vmul.f32 %v243, %v245
    %v262 = vadd.f32 %v165, %v246
    %v263 = vadd.f32 %v166, %v247
    %v264 = vadd.f32 %v167, %v248
    %v265 = vadd.f32 %v168, %v249
    %v266 = vadd.f32 %v169, %v250
    %v267 = vadd.f32 %v170, %v251
    %v268 = vadd.f32 %v171, %v252
    %v269 = vadd.f32 %v172, %v253
    %v270 = vadd.f32 %v173, %v254
    %v271 = vadd.f32 %v174, %v255
    %v272 = vadd.f32 %v175, %v256
    %v273 = vadd.f32 %v176, %v257
    %v274 = vadd.f32 %v177, %v258
    %v275 = vadd.f32 %v178, %v259
    %v276 = vadd.f32 %v179, %v260
    %v277 = vadd.f32 %v180, %v261
    %278 = vset.pattern.permute.xlu0 2
    %279 = vperm.xlu0 %278, %v67
    %v280 = vpop.permute.xlu0 %279
    %282 = vset.pattern.permute.xlu0 2
    %283 = vperm.xlu0 %282, %v68
    %v284 = vpop.permute.xlu0 %283
    %286 = vset.pattern.permute.xlu0 2
    %287 = vperm.xlu0 %286, %v69
    %v288 = vpop.permute.xlu0 %287
    %290 = vset.pattern.permute.xlu0 2
    %291 = vperm.xlu0 %290, %v70
    %v292 = vpop.permute.xlu0 %291
    %294 = vset.pattern.permute.xlu0 2
    %295 = vperm.xlu0 %294, %v71
    %v296 = vpop.permute.xlu0 %295
    %298 = vset.pattern.permute.xlu0 2
    %299 = vperm.xlu0 %298, %v72
    %v300 = vpop.permute.xlu0 %299
    %302 = vset.pattern.permute.xlu0 2
    %303 = vperm.xlu0 %302, %v73
    %v304 = vpop.permute.xlu0 %303
    %306 = vset.pattern.permute.xlu0 2
    %307 = vperm.xlu0 %306, %v74
    %v308 = vpop.permute.xlu0 %307
    %310 = vset.pattern.permute.xlu0 2
    %311 = vperm.xlu0 %310, %v75
    %v312 = vpop.permute.xlu0 %311
    %314 = vset.pattern.permute.xlu0 2
    %315 = vperm.xlu0 %314, %v76
    %v316 = vpop.permute.xlu0 %315
    %318 = vset.pattern.permute.xlu0 2
    %319 = vperm.xlu0 %318, %v77
    %v320 = vpop.permute.xlu0 %319
    %322 = vset.pattern.permute.xlu0 2
    %323 = vperm.xlu0 %322, %v78
    %v324 = vpop.permute.xlu0 %323
    %326 = vset.pattern.permute.xlu0 2
    %327 = vperm.xlu0 %326, %v79
    %v328 = vpop.permute.xlu0 %327
    %330 = vset.pattern.permute.xlu0 2
    %331 = vperm.xlu0 %330, %v80
    %v332 = vpop.permute.xlu0 %331
    %334 = vset.pattern.permute.xlu0 2
    %335 = vperm.xlu0 %334, %v81
    %v336 = vpop.permute.xlu0 %335
    %338 = vset.pattern.permute.xlu0 2
    %339 = vperm.xlu0 %338, %v82
    %v340 = vpop.permute.xlu0 %339
    %v342 = vperm.slane %v83, 2
    %v343 = vmul.f32 %v280, %v342
    %v344 = vmul.f32 %v284, %v342
    %v345 = vmul.f32 %v288, %v342
    %v346 = vmul.f32 %v292, %v342
    %v347 = vmul.f32 %v296, %v342
    %v348 = vmul.f32 %v300, %v342
    %v349 = vmul.f32 %v304, %v342
    %v350 = vmul.f32 %v308, %v342
    %v351 = vmul.f32 %v312, %v342
    %v352 = vmul.f32 %v316, %v342
    %v353 = vmul.f32 %v320, %v342
    %v354 = vmul.f32 %v324, %v342
    %v355 = vmul.f32 %v328, %v342
    %v356 = vmul.f32 %v332, %v342
    %v357 = vmul.f32 %v336, %v342
    %v358 = vmul.f32 %v340, %v342
    %v359 = vadd.f32 %v262, %v343
    %v360 = vadd.f32 %v263, %v344
    %v361 = vadd.f32 %v264, %v345
    %v362 = vadd.f32 %v265, %v346
    %v363 = vadd.f32 %v266, %v347
    %v364 = vadd.f32 %v267, %v348
    %v365 = vadd.f32 %v268, %v349
    %v366 = vadd.f32 %v269, %v350
    %v367 = vadd.f32 %v270, %v351
    %v368 = vadd.f32 %v271, %v352
    %v369 = vadd.f32 %v272, %v353
    %v370 = vadd.f32 %v273, %v354
    %v371 = vadd.f32 %v274, %v355
    %v372 = vadd.f32 %v275, %v356
    %v373 = vadd.f32 %v276, %v357
    %v374 = vadd.f32 %v277, %v358
    %v375 = vperm.slane %v83, 3
    %v376 = vmul.f32 %v87, %v375
    %v377 = vmul.f32 %v92, %v375
    %v378 = vmul.f32 %v97, %v375
    %v379 = vmul.f32 %v102, %v375
    %v380 = vmul.f32 %v107, %v375
    %v381 = vmul.f32 %v112, %v375
    %v382 = vmul.f32 %v117, %v375
    %v383 = vmul.f32 %v122, %v375
    %v384 = vmul.f32 %v127, %v375
    %v385 = vmul.f32 %v132, %v375
    %v386 = vmul.f32 %v137, %v375
    %v387 = vmul.f32 %v142, %v375
    %v388 = vmul.f32 %v147, %v375
    %v389 = vmul.f32 %v152, %v375
    %v390 = vmul.f32 %v157, %v375
    %v391 = vmul.f32 %v162, %v375
    %v392 = vperm.slane %v83, 4
    %v393 = vmul.f32 %v183, %v392
    %v394 = vmul.f32 %v187, %v392
    %v395 = vmul.f32 %v191, %v392
    %v396 = vmul.f32 %v195, %v392
    %v397 = vmul.f32 %v199, %v392
    %v398 = vmul.f32 %v203, %v392
    %v399 = vmul.f32 %v207, %v392
    %v400 = vmul.f32 %v211, %v392
    %v401 = vmul.f32 %v215, %v392
    %v402 = vmul.f32 %v219, %v392
    %v403 = vmul.f32 %v223, %v392
    %v404 = vmul.f32 %v227, %v392
    %v405 = vmul.f32 %v231, %v392
    %v406 = vmul.f32 %v235, %v392
    %v407 = vmul.f32 %v239, %v392
    %v408 = vmul.f32 %v243, %v392
    %v409 = vadd.f32 %v376, %v393
    %v410 = vadd.f32 %v377, %v394
    %v411 = vadd.f32 %v378, %v395
    %v412 = vadd.f32 %v379, %v396
    %v413 = vadd.f32 %v380, %v397
    %v414 = vadd.f32 %v381, %v398
    %v415 = vadd.f32 %v382, %v399
    %v416 = vadd.f32 %v383, %v400
    %v417 = vadd.f32 %v384, %v401
    %v418 = vadd.f32 %v385, %v402
    %v419 = vadd.f32 %v386, %v403
    %v420 = vadd.f32 %v387, %v404
    %v421 = vadd.f32 %v388, %v405
    %v422 = vadd.f32 %v389, %v406
    %v423 = vadd.f32 %v390, %v407
    %v424 = vadd.f32 %v391, %v408
    %v425 = vperm.slane %v83, 5
    %v426 = vmul.f32 %v280, %v425
    %v427 = vmul.f32 %v284, %v425
    %v428 = vmul.f32 %v288, %v425
    %v429 = vmul.f32 %v292, %v425
    %v430 = vmul.f32 %v296, %v425
    %v431 = vmul.f32 %v300, %v425
    %v432 = vmul.f32 %v304, %v425
    %v433 = vmul.f32 %v308, %v425
    %v434 = vmul.f32 %v312, %v425
    %v435 = vmul.f32 %v316, %v425
    %v436 = vmul.f32 %v320, %v425
    %v437 = vmul.f32 %v324, %v425
    %v438 = vmul.f32 %v328, %v425
    %v439 = vmul.f32 %v332, %v425
    %v440 = vmul.f32 %v336, %v425
    %v441 = vmul.f32 %v340, %v425
    %v442 = vadd.f32 %v409, %v426
    %v443 = vadd.f32 %v410, %v427
    %v444 = vadd.f32 %v411, %v428
    %v445 = vadd.f32 %v412, %v429
    %v446 = vadd.f32 %v413, %v430
    %v447 = vadd.f32 %v414, %v431
    %v448 = vadd.f32 %v415, %v432
    %v449 = vadd.f32 %v416, %v433
    %v450 = vadd.f32 %v417, %v434
    %v451 = vadd.f32 %v418, %v435
    %v452 = vadd.f32 %v419, %v436
    %v453 = vadd.f32 %v420, %v437
    %v454 = vadd.f32 %v421, %v438
    %v455 = vadd.f32 %v422, %v439
    %v456 = vadd.f32 %v423, %v440
    %v457 = vadd.f32 %v424, %v441
    %v458 = vadd.f32 %v442, 0.0
    %v459 = vadd.f32 %v443, 0.0
    %v460 = vadd.f32 %v359, %v444
    %v461 = vadd.f32 %v360, %v445
    %v462 = vadd.f32 %v361, %v446
    %v463 = vadd.f32 %v362, %v447
    %v464 = vadd.f32 %v363, %v448
    %v465 = vadd.f32 %v364, %v449
    %v466 = vadd.f32 %v365, %v450
    %v467 = vadd.f32 %v366, %v451
    %v468 = vadd.f32 %v367, %v452
    %v469 = vadd.f32 %v368, %v453
    %v470 = vadd.f32 %v369, %v454
    %v471 = vadd.f32 %v370, %v455
    %v472 = vadd.f32 %v371, %v456
    %v473 = vadd.f32 %v372, %v457
    %v474 = vadd.f32 %v373, 0.0
    %v475 = vadd.f32 %v374, 0.0
    %v476 = vld [vmem:[%s2] sm:$0x1]
    %v478 = vperm.slane %v476, 0
    %v480 = vadd.f32 %v458, %v478
    %v481 = vadd.f32 %v459, %v478
    %v482 = vadd.f32 %v460, %v478
    %v483 = vadd.f32 %v461, %v478
    %v484 = vadd.f32 %v462, %v478
    %v485 = vadd.f32 %v463, %v478
    %v486 = vadd.f32 %v464, %v478
    %v487 = vadd.f32 %v465, %v478
    %v488 = vadd.f32 %v466, %v478
    %v489 = vadd.f32 %v467, %v478
    %v490 = vadd.f32 %v468, %v478
    %v491 = vadd.f32 %v469, %v478
    %v492 = vadd.f32 %v470, %v478
    %v493 = vadd.f32 %v471, %v478
    %v494 = vadd.f32 %v472, %v478
    %v495 = vadd.f32 %v473, %v478
    %v496 = vadd.f32 %v474, %v478
    %v497 = vadd.f32 %v475, %v478
    %v498 = vmax.f32 %v480, 0.0
    %v499 = vmax.f32 %v481, 0.0
    %v500 = vmax.f32 %v482, 0.0
    %v501 = vmax.f32 %v483, 0.0
    %v502 = vmax.f32 %v484, 0.0
    %v503 = vmax.f32 %v485, 0.0
    %v504 = vmax.f32 %v486, 0.0
    %v505 = vmax.f32 %v487, 0.0
    %v506 = vmax.f32 %v488, 0.0
    %v507 = vmax.f32 %v489, 0.0
    %v508 = vmax.f32 %v490, 0.0
    %v509 = vmax.f32 %v491, 0.0
    %v510 = vmax.f32 %v492, 0.0
    %v511 = vmax.f32 %v493, 0.0
    %v512 = vmax.f32 %v494, 0.0
    %v513 = vmax.f32 %v495, 0.0
    %v514 = vmax.f32 %v496, 0.0
    %v515 = vmax.f32 %v497, 0.0
    %v516 = vmax.f32 %v498, %v500
    %v517 = vmax.f32 %v499, %v501
    %v518 = vmax.f32 %v500, %v502
    %v519 = vmax.f32 %v501, %v503
    %v520 = vmax.f32 %v502, %v504
    %v521 = vmax.f32 %v503, %v505
    %v522 = vmax.f32 %v504, %v506
    %v523 = vmax.f32 %v505, %v507
    %v524 = vmax.f32 %v506, %v508
    %v525 = vmax.f32 %v507, %v509
    %v526 = vmax.f32 %v508, %v510
    %v527 = vmax.f32 %v509, %v511
    %v528 = vmax.f32 %v510, %v512
    %v529 = vmax.f32 %v511, %v513
    %v530 = vmax.f32 %v512, %v514
    %v531 = vmax.f32 %v513, %v515
    %v532 = vpack.c.bf16 %v516, %v516
    %v533 = vpack.c.bf16 %v517, %v517
    %v534 = vpack.c.bf16 %v518, %v518
    %v535 = vpack.c.bf16 %v519, %v519
    %v536 = vpack.c.bf16 %v520, %v520
    %v537 = vpack.c.bf16 %v521, %v521
    %v538 = vpack.c.bf16 %v522, %v522
    %v539 = vpack.c.bf16 %v523, %v523
    %v540 = vpack.c.bf16 %v524, %v524
    %v541 = vpack.c.bf16 %v525, %v525
    %v542 = vpack.c.bf16 %v526, %v526
    %v543 = vpack.c.bf16 %v527, %v527
    %v544 = vpack.c.bf16 %v528, %v528
    %v545 = vpack.c.bf16 %v529, %v529
    %v546 = vpack.c.bf16 %v530, %v530
    %v547 = vpack.c.bf16 %v531, %v531
    %v548 = vld [vmem:[%s3] sm:$0xf]
    %v549 = vld [vmem:[%s3 + $0x4] sm:$0xf]
    %v550 = vld [vmem:[%s3 + $0x8] sm:$0xf]
    %v551 = vld [vmem:[%s3 + $0xc] sm:$0xf]
    %v568 = vunpack.c.l.b16 %v532
    %v569 = vunpack.c.l.b16 %v533
    %v570 = vunpack.c.l.b16 %v534
    %v571 = vunpack.c.l.b16 %v535
    %v572 = vunpack.c.l.b16 %v536
    %v573 = vunpack.c.l.b16 %v537
    %v574 = vunpack.c.l.b16 %v538
    %v575 = vunpack.c.l.b16 %v539
    %v576 = vunpack.c.l.b16 %v540
    %v577 = vunpack.c.l.b16 %v541
    %v578 = vunpack.c.l.b16 %v542
    %v579 = vunpack.c.l.b16 %v543
    %v580 = vunpack.c.l.b16 %v544
    %v581 = vunpack.c.l.b16 %v545
    %v582 = vunpack.c.l.b16 %v546
    %v583 = vunpack.c.l.b16 %v547
    %v584 = vpack.c.b16 %v569, %v568
    %v585 = vpack.c.b16 %v571, %v570
    %v586 = vpack.c.b16 %v573, %v572
    %v587 = vpack.c.b16 %v575, %v574
    %v588 = vpack.c.b16 %v577, %v576
    %v589 = vpack.c.b16 %v579, %v578
    %v590 = vpack.c.b16 %v581, %v580
    %v591 = vpack.c.b16 %v583, %v582
    %v596 = vunpack.c.l.b16 %v548
    %v597 = vunpack.c.l.b16 %v549
    %v598 = vunpack.c.l.b16 %v550
    %v599 = vunpack.c.l.b16 %v551
    %v600 = vpack.c.b16 %v597, %v596
    %v601 = vpack.c.b16 %v599, %v598
    %vm604 = vcmask 261120
    %v606 = vsel %vm604, %v584, 0
    %v609 = vsel %vm604, %v585, 0
    %v612 = vsel %vm604, %v586, 0
    %v615 = vsel %vm604, %v587, 0
    %v618 = vsel %vm604, %v588, 0
    %v621 = vsel %vm604, %v589, 0
    %v624 = vsel %vm604, %v590, 0
    %v627 = vsel %vm604, %v591, 0
    %629 = vmatpush.bf16.msra.mxu0 0
    %630 = vmatpush.bf16.msra.mxu0 0
    %631 = vmatpush.bf16.msra.mxu0 0
    %632 = vmatpush.bf16.msra.mxu0 0
    %633 = vmatpush.bf16.msra.mxu0 0
    %634 = vmatpush.bf16.msra.mxu0 0
    %635 = vmatpush.bf16.msra.mxu0 %v601
    %636 = vmatpush.bf16.msra.mxu0 %v600
    %637 = vmatmul.bf16.gmra.mxu0 %v606
    %v638 = vpop.f32.mrf.mxu0
    %v639 = vadd.f32 0.0, %v638
    %v640 = vpop.f32.mrf.mxu0
    %v641 = vadd.f32 0.0, %v640
    %642 = vmatmul.bf16.gmra.mxu0 %v609
    %v643 = vpop.f32.mrf.mxu0
    %v644 = vadd.f32 0.0, %v643
    %v645 = vpop.f32.mrf.mxu0
    %v646 = vadd.f32 0.0, %v645
    %647 = vmatmul.bf16.gmra.mxu0 %v612
    %v648 = vpop.f32.mrf.mxu0
    %v649 = vadd.f32 0.0, %v648
    %v650 = vpop.f32.mrf.mxu0
    %v651 = vadd.f32 0.0, %v650
    %652 = vmatmul.bf16.gmra.mxu0 %v615
    %v653 = vpop.f32.mrf.mxu0
    %v654 = vadd.f32 0.0, %v653
    %v655 = vpop.f32.mrf.mxu0
    %v656 = vadd.f32 0.0, %v655
    %657 = vmatmul.bf16.gmra.mxu0 %v618
    %v658 = vpop.f32.mrf.mxu0
    %v659 = vadd.f32 0.0, %v658
    %v660 = vpop.f32.mrf.mxu0
    %v661 = vadd.f32 0.0, %v660
    %662 = vmatmul.bf16.gmra.mxu0 %v621
    %v663 = vpop.f32.mrf.mxu0
    %v664 = vadd.f32 0.0, %v663
    %v665 = vpop.f32.mrf.mxu0
    %v666 = vadd.f32 0.0, %v665
    %667 = vmatmul.bf16.gmra.mxu0 %v624
    %v668 = vpop.f32.mrf.mxu0
    %v669 = vadd.f32 0.0, %v668
    %v670 = vpop.f32.mrf.mxu0
    %v671 = vadd.f32 0.0, %v670
    %672 = vmatmul.bf16.gmra.mxu0 %v627
    %v673 = vpop.f32.mrf.mxu0
    %v674 = vadd.f32 0.0, %v673
    %v675 = vpop.f32.mrf.mxu0
    %v676 = vadd.f32 0.0, %v675
    %677 = vdwg.mxu0
    %695 = vrot.lane.b32.xlu0 %v639, 64
    %v696 = vpop.permute.xlu0 %695
    %697 = vrot.lane.b32.xlu0 %v641, 64
    %v698 = vpop.permute.xlu0 %697
    %699 = vrot.lane.b32.xlu0 %v644, 64
    %v700 = vpop.permute.xlu0 %699
    %701 = vrot.lane.b32.xlu0 %v646, 64
    %v702 = vpop.permute.xlu0 %701
    %703 = vrot.lane.b32.xlu0 %v649, 64
    %v704 = vpop.permute.xlu0 %703
    %705 = vrot.lane.b32.xlu0 %v651, 64
    %v706 = vpop.permute.xlu0 %705
    %707 = vrot.lane.b32.xlu0 %v654, 64
    %v708 = vpop.permute.xlu0 %707
    %709 = vrot.lane.b32.xlu0 %v656, 64
    %v710 = vpop.permute.xlu0 %709
    %711 = vrot.lane.b32.xlu0 %v659, 64
    %v712 = vpop.permute.xlu0 %711
    %713 = vrot.lane.b32.xlu0 %v661, 64
    %v714 = vpop.permute.xlu0 %713
    %715 = vrot.lane.b32.xlu0 %v664, 64
    %v716 = vpop.permute.xlu0 %715
    %717 = vrot.lane.b32.xlu0 %v666, 64
    %v718 = vpop.permute.xlu0 %717
    %719 = vrot.lane.b32.xlu0 %v669, 64
    %v720 = vpop.permute.xlu0 %719
    %721 = vrot.lane.b32.xlu0 %v671, 64
    %v722 = vpop.permute.xlu0 %721
    %723 = vrot.lane.b32.xlu0 %v674, 64
    %v724 = vpop.permute.xlu0 %723
    %725 = vrot.lane.b32.xlu0 %v676, 64
    %v726 = vpop.permute.xlu0 %725
    %727 = vrot.lane.b32.xlu0 0.0, 64
    %v728 = vpop.permute.xlu0 %727
    %v746 = vadd.f32 %v696, 0.0
    %v747 = vadd.f32 %v698, 0.0
    %v748 = vadd.f32 %v639, %v700
    %v749 = vadd.f32 %v641, %v702
    %v750 = vadd.f32 %v644, %v704
    %v751 = vadd.f32 %v646, %v706
    %v752 = vadd.f32 %v649, %v708
    %v753 = vadd.f32 %v651, %v710
    %v754 = vadd.f32 %v654, %v712
    %v755 = vadd.f32 %v656, %v714
    %v756 = vadd.f32 %v659, %v716
    %v757 = vadd.f32 %v661, %v718
    %v758 = vadd.f32 %v664, %v720
    %v759 = vadd.f32 %v666, %v722
    %v760 = vadd.f32 %v669, %v724
    %v761 = vadd.f32 %v671, %v726
    %v762 = vadd.f32 %v674, %v728
    %v763 = vadd.f32 %v676, %v728
    %v764 = vld [vmem:[#allocation3] sm:$0x1]
    %v766 = vperm.slane %v764, 0
    %v768 = vadd.f32 %v746, %v766
    %v769 = vadd.f32 %v747, %v766
    %v770 = vadd.f32 %v748, %v766
    %v771 = vadd.f32 %v749, %v766
    %v772 = vadd.f32 %v750, %v766
    %v773 = vadd.f32 %v751, %v766
    %v774 = vadd.f32 %v752, %v766
    %v775 = vadd.f32 %v753, %v766
    %v776 = vadd.f32 %v754, %v766
    %v777 = vadd.f32 %v755, %v766
    %v778 = vadd.f32 %v756, %v766
    %v779 = vadd.f32 %v757, %v766
    %v780 = vadd.f32 %v758, %v766
    %v781 = vadd.f32 %v759, %v766
    %v782 = vadd.f32 %v760, %v766
    %v783 = vadd.f32 %v761, %v766
    %v784 = vadd.f32 %v762, %v766
    %v785 = vadd.f32 %v763, %v766
    %v786 = vmax.f32 %v768, 0.0
    %v787 = vmax.f32 %v769, 0.0
    %v788 = vmax.f32 %v770, 0.0
    %v789 = vmax.f32 %v771, 0.0
    %v790 = vmax.f32 %v772, 0.0
    %v791 = vmax.f32 %v773, 0.0
    %v792 = vmax.f32 %v774, 0.0
    %v793 = vmax.f32 %v775, 0.0
    %v794 = vmax.f32 %v776, 0.0
    %v795 = vmax.f32 %v777, 0.0
    %v796 = vmax.f32 %v778, 0.0
    %v797 = vmax.f32 %v779, 0.0
    %v798 = vmax.f32 %v780, 0.0
    %v799 = vmax.f32 %v781, 0.0
    %v800 = vmax.f32 %v782, 0.0
    %v801 = vmax.f32 %v783, 0.0
    %v802 = vmax.f32 %v784, 0.0
    %v803 = vmax.f32 %v785, 0.0
    %v804 = vmax.f32 %v786, %v788
    %v805 = vmax.f32 %v787, %v789
    %v806 = vmax.f32 %v788, %v790
    %v807 = vmax.f32 %v789, %v791
    %v808 = vmax.f32 %v790, %v792
    %v809 = vmax.f32 %v791, %v793
    %v810 = vmax.f32 %v792, %v794
    %v811 = vmax.f32 %v793, %v795
    %v812 = vmax.f32 %v794, %v796
    %v813 = vmax.f32 %v795, %v797
    %v814 = vmax.f32 %v796, %v798
    %v815 = vmax.f32 %v797, %v799
    %v816 = vmax.f32 %v798, %v800
    %v817 = vmax.f32 %v799, %v801
    %v818 = vmax.f32 %v800, %v802
    %v819 = vmax.f32 %v801, %v803
    %v820 = vpack.c.bf16 %v804, %v804
    %v821 = vpack.c.bf16 %v805, %v805
    %v822 = vpack.c.bf16 %v806, %v806
    %v823 = vpack.c.bf16 %v807, %v807
    %v824 = vpack.c.bf16 %v808, %v808
    %v825 = vpack.c.bf16 %v809, %v809
    %v826 = vpack.c.bf16 %v810, %v810
    %v827 = vpack.c.bf16 %v811, %v811
    %v828 = vpack.c.bf16 %v812, %v812
    %v829 = vpack.c.bf16 %v813, %v813
    %v830 = vpack.c.bf16 %v814, %v814
    %v831 = vpack.c.bf16 %v815, %v815
    %v832 = vpack.c.bf16 %v816, %v816
    %v833 = vpack.c.bf16 %v817, %v817
    %v834 = vpack.c.bf16 %v818, %v818
    %v835 = vpack.c.bf16 %v819, %v819
    %v836 = vld [vmem:[%s5] sm:$0xff]
    %v837 = vld [vmem:[%s5 + $0x8] sm:$0xff]
    %v838 = vld [vmem:[%s5 + $0x10] sm:$0xff]
    %v839 = vld [vmem:[%s5 + $0x18] sm:$0xff]
    %v840 = vld [vmem:[%s5 + $0x20] sm:$0xff]
    %v841 = vld [vmem:[%s5 + $0x28] sm:$0xff]
    %v842 = vld [vmem:[%s5 + $0x30] sm:$0xff]
    %v843 = vld [vmem:[%s5 + $0x38] sm:$0xff]
    %v844 = vld [vmem:[%s6] sm:$0x3]
    %v846 = vperm.slane %v844, 0
    %v847 = vperm.slane %v844, 1
    %v866 = vunpack.c.l.b16 %v820
    %v867 = vunpack.c.l.b16 %v821
    %v868 = vunpack.c.l.b16 %v822
    %v869 = vunpack.c.l.b16 %v823
    %v870 = vunpack.c.l.b16 %v824
    %v871 = vunpack.c.l.b16 %v825
    %v872 = vunpack.c.l.b16 %v826
    %v873 = vunpack.c.l.b16 %v827
    %v874 = vunpack.c.l.b16 %v828
    %v875 = vunpack.c.l.b16 %v829
    %v876 = vunpack.c.l.b16 %v830
    %v877 = vunpack.c.l.b16 %v831
    %v878 = vunpack.c.l.b16 %v832
    %v879 = vunpack.c.l.b16 %v833
    %v880 = vunpack.c.l.b16 %v834
    %v881 = vunpack.c.l.b16 %v835
    %v882 = vpack.c.b16 %v867, %v866
    %v883 = vpack.c.b16 %v869, %v868
    %v884 = vpack.c.b16 %v871, %v870
    %v885 = vpack.c.b16 %v873, %v872
    %v886 = vpack.c.b16 %v875, %v874
    %v887 = vpack.c.b16 %v877, %v876
    %v888 = vpack.c.b16 %v879, %v878
    %v889 = vpack.c.b16 %v881, %v880
    %v898 = vunpack.c.l.b16 %v836
    %v899 = vunpack.c.h.b16 %v836
    %v900 = vunpack.c.l.b16 %v837
    %v901 = vunpack.c.h.b16 %v837
    %v902 = vunpack.c.l.b16 %v838
    %v903 = vunpack.c.h.b16 %v838
    %v904 = vunpack.c.l.b16 %v839
    %v905 = vunpack.c.h.b16 %v839
    %v906 = vunpack.c.l.b16 %v840
    %v907 = vunpack.c.h.b16 %v840
    %v908 = vunpack.c.l.b16 %v841
    %v909 = vunpack.c.h.b16 %v841
    %v910 = vunpack.c.l.b16 %v842
    %v911 = vunpack.c.h.b16 %v842
    %v912 = vunpack.c.l.b16 %v843
    %v913 = vunpack.c.h.b16 %v843
    %v914 = vpack.c.b16 %v900, %v898
    %v915 = vpack.c.b16 %v901, %v899
    %v916 = vpack.c.b16 %v904, %v902
    %v917 = vpack.c.b16 %v905, %v903
    %v918 = vpack.c.b16 %v908, %v906
    %v919 = vpack.c.b16 %v909, %v907
    %v920 = vpack.c.b16 %v912, %v910
    %v921 = vpack.c.b16 %v913, %v911
    %vm930 = vcmask 523264
    %v932 = vsel %vm930, %v882, 0
    %v935 = vsel %vm930, %v883, 0
    %v938 = vsel %vm930, %v884, 0
    %v941 = vsel %vm930, %v885, 0
    %v944 = vsel %vm930, %v886, 0
    %v947 = vsel %vm930, %v887, 0
    %v950 = vsel %vm930, %v888, 0
    %v953 = vsel %vm930, %v889, 0
    %955 = vmatpush.bf16.msra.mxu0 0
    %956 = vmatpush.bf16.msra.mxu0 0
    %957 = vmatpush.bf16.msra.mxu0 0
    %958 = vmatpush.bf16.msra.mxu0 0
    %959 = vmatpush.bf16.msra.mxu0 %v920
    %960 = vmatpush.bf16.msra.mxu0 %v918
    %961 = vmatpush.bf16.msra.mxu0 %v916
    %962 = vmatpush.bf16.msra.mxu0 %v914
    %963 = vmatmul.bf16.gmra.mxu0 %v932
    %v964 = vpop.f32.mrf.mxu0
    %v965 = vadd.f32 %v846, %v964
    %v966 = vpop.f32.mrf.mxu0
    %v967 = vadd.f32 %v846, %v966
    %968 = vmatmul.bf16.gmra.mxu0 %v935
    %v969 = vpop.f32.mrf.mxu0
    %v970 = vadd.f32 %v846, %v969
    %v971 = vpop.f32.mrf.mxu0
    %v972 = vadd.f32 %v846, %v971
    %973 = vmatmul.bf16.gmra.mxu0 %v938
    %v974 = vpop.f32.mrf.mxu0
    %v975 = vadd.f32 %v846, %v974
    %v976 = vpop.f32.mrf.mxu0
    %v977 = vadd.f32 %v846, %v976
    %978 = vmatmul.bf16.gmra.mxu0 %v941
    %v979 = vpop.f32.mrf.mxu0
    %v980 = vadd.f32 %v846, %v979
    %v981 = vpop.f32.mrf.mxu0
    %v982 = vadd.f32 %v846, %v981
    %983 = vmatmul.bf16.gmra.mxu0 %v944
    %v984 = vpop.f32.mrf.mxu0
    %v985 = vadd.f32 %v846, %v984
    %v986 = vpop.f32.mrf.mxu0
    %v987 = vadd.f32 %v846, %v986
    %988 = vmatmul.bf16.gmra.mxu0 %v947
    %v989 = vpop.f32.mrf.mxu0
    %v990 = vadd.f32 %v846, %v989
    %v991 = vpop.f32.mrf.mxu0
    %v992 = vadd.f32 %v846, %v991
    %993 = vmatmul.bf16.gmra.mxu0 %v950
    %v994 = vpop.f32.mrf.mxu0
    %v995 = vadd.f32 %v846, %v994
    %v996 = vpop.f32.mrf.mxu0
    %v997 = vadd.f32 %v846, %v996
    %998 = vmatmul.bf16.gmra.mxu0 %v953
    %v999 = vpop.f32.mrf.mxu0
    %v1000 = vadd.f32 %v846, %v999
    %v1001 = vpop.f32.mrf.mxu0
    %v1002 = vadd.f32 %v846, %v1001
    %1003 = vdwg.mxu0
    %1004 = vmatpush.bf16.msra.mxu0 0
    %1005 = vmatpush.bf16.msra.mxu0 0
    %1006 = vmatpush.bf16.msra.mxu0 0
    %1007 = vmatpush.bf16.msra.mxu0 0
    %1008 = vmatpush.bf16.msra.mxu0 %v921
    %1009 = vmatpush.bf16.msra.mxu0 %v919
    %1010 = vmatpush.bf16.msra.mxu0 %v917
    %1011 = vmatpush.bf16.msra.mxu0 %v915
    %1012 = vmatmul.bf16.gmra.mxu0 %v932
    %v1013 = vpop.f32.mrf.mxu0
    %v1014 = vadd.f32 %v847, %v1013
    %v1015 = vpop.f32.mrf.mxu0
    %v1016 = vadd.f32 %v847, %v1015
    %1017 = vmatmul.bf16.gmra.mxu0 %v935
    %v1018 = vpop.f32.mrf.mxu0
    %v1019 = vadd.f32 %v847, %v1018
    %v1020 = vpop.f32.mrf.mxu0
    %v1021 = vadd.f32 %v847, %v1020
    %1022 = vmatmul.bf16.gmra.mxu0 %v938
    %v1023 = vpop.f32.mrf.mxu0
    %v1024 = vadd.f32 %v847, %v1023
    %v1025 = vpop.f32.mrf.mxu0
    %v1026 = vadd.f32 %v847, %v1025
    %1027 = vmatmul.bf16.gmra.mxu0 %v941
    %v1028 = vpop.f32.mrf.mxu0
    %v1029 = vadd.f32 %v847, %v1028
    %v1030 = vpop.f32.mrf.mxu0
    %v1031 = vadd.f32 %v847, %v1030
    %1032 = vmatmul.bf16.gmra.mxu0 %v944
    %v1033 = vpop.f32.mrf.mxu0
    %v1034 = vadd.f32 %v847, %v1033
    %v1035 = vpop.f32.mrf.mxu0
    %v1036 = vadd.f32 %v847, %v1035
    %1037 = vmatmul.bf16.gmra.mxu0 %v947
    %v1038 = vpop.f32.mrf.mxu0
    %v1039 = vadd.f32 %v847, %v1038
    %v1040 = vpop.f32.mrf.mxu0
    %v1041 = vadd.f32 %v847, %v1040
    %1042 = vmatmul.bf16.gmra.mxu0 %v950
    %v1043 = vpop.f32.mrf.mxu0
    %v1044 = vadd.f32 %v847, %v1043
    %v1045 = vpop.f32.mrf.mxu0
    %v1046 = vadd.f32 %v847, %v1045
    %1047 = vmatmul.bf16.gmra.mxu0 %v953
    %v1048 = vpop.f32.mrf.mxu0
    %v1049 = vadd.f32 %v847, %v1048
    %v1050 = vpop.f32.mrf.mxu0
    %v1051 = vadd.f32 %v847, %v1050
    %1052 = vdwg.mxu0
    %1053 = vst [vmem:[#allocation2] sm:$0xff] %v965
    %1054 = vst [vmem:[#allocation2 + $0x8] sm:$0xff] %v1014
    %1055 = vst [vmem:[#allocation2 + $0x10] sm:$0xff] %v967
    %1056 = vst [vmem:[#allocation2 + $0x18] sm:$0xff] %v1016
    %1057 = vst [vmem:[#allocation2 + $0x20] sm:$0xff] %v970
    %1058 = vst [vmem:[#allocation2 + $0x28] sm:$0xff] %v1019
    %1059 = vst [vmem:[#allocation2 + $0x30] sm:$0xff] %v972
    %1060 = vst [vmem:[#allocation2 + $0x38] sm:$0xff] %v1021
    %1061 = vst [vmem:[#allocation2 + $0x40] sm:$0xff] %v975
    %1062 = vst [vmem:[#allocation2 + $0x48] sm:$0xff] %v1024
    %1063 = vst [vmem:[#allocation2 + $0x50] sm:$0xff] %v977
    %1064 = vst [vmem:[#allocation2 + $0x58] sm:$0xff] %v1026
    %1065 = vst [vmem:[#allocation2 + $0x60] sm:$0xff] %v980
    %1066 = vst [vmem:[#allocation2 + $0x68] sm:$0xff] %v1029
    %1067 = vst [vmem:[#allocation2 + $0x70] sm:$0xff] %v982
    %1068 = vst [vmem:[#allocation2 + $0x78] sm:$0xff] %v1031
    %1069 = vst [vmem:[#allocation2 + $0x80] sm:$0xff] %v985
    %1070 = vst [vmem:[#allocation2 + $0x88] sm:$0xff] %v1034
    %1071 = vst [vmem:[#allocation2 + $0x90] sm:$0xff] %v987
    %1072 = vst [vmem:[#allocation2 + $0x98] sm:$0xff] %v1036
    %1073 = vst [vmem:[#allocation2 + $0xa0] sm:$0xff] %v990
    %1074 = vst [vmem:[#allocation2 + $0xa8] sm:$0xff] %v1039
    %1075 = vst [vmem:[#allocation2 + $0xb0] sm:$0xff] %v992
    %1076 = vst [vmem:[#allocation2 + $0xb8] sm:$0xff] %v1041
    %1077 = vst [vmem:[#allocation2 + $0xc0] sm:$0xff] %v995
    %1078 = vst [vmem:[#allocation2 + $0xc8] sm:$0xff] %v1044
    %1079 = vst [vmem:[#allocation2 + $0xd0] sm:$0xff] %v997
    %1080 = vst [vmem:[#allocation2 + $0xd8] sm:$0xff] %v1046
    %1081 = vst [vmem:[#allocation2 + $0xe0] sm:$0xff] %v1000
    %1082 = vst [vmem:[#allocation2 + $0xe8] sm:$0xff] %v1049
    %1083 = vst [vmem:[#allocation2 + $0xf0] sm:$0xff] %v1002
    %1084 = vst [vmem:[#allocation2 + $0xf8] sm:$0xff] %v1051
    %v1085 = vld [vmem:[%s7] sm:$0xff]
    %v1086 = vld [vmem:[%s7 + $0x8] sm:$0xff]
    %v1087 = vld [vmem:[%s7 + $0x10] sm:$0xff]
    %v1088 = vld [vmem:[%s7 + $0x18] sm:$0xff]
    %v1089 = vld [vmem:[%s7 + $0x20] sm:$0xff]
    %v1090 = vld [vmem:[%s7 + $0x28] sm:$0xff]
    %v1091 = vld [vmem:[%s7 + $0x30] sm:$0xff]
    %v1092 = vld [vmem:[%s7 + $0x38] sm:$0xff]
    %v1093 = vld [vmem:[#allocation2] sm:$0xff]
    %v1094 = vld [vmem:[#allocation2 + $0x8] sm:$0xff]
    %v1095 = vld [vmem:[#allocation2 + $0x10] sm:$0xff]
    %v1096 = vld [vmem:[#allocation2 + $0x18] sm:$0xff]
    %v1105 = vunpack.c.l.b16 %v1085
    %v1106 = vunpack.c.h.b16 %v1085
    %v1107 = vunpack.c.l.b16 %v1086
    %v1108 = vunpack.c.h.b16 %v1086
    %v1109 = vunpack.c.l.b16 %v1087
    %v1110 = vunpack.c.h.b16 %v1087
    %v1111 = vunpack.c.l.b16 %v1088
    %v1112 = vunpack.c.h.b16 %v1088
    %v1113 = vunpack.c.l.b16 %v1089
    %v1114 = vunpack.c.h.b16 %v1089
    %v1115 = vunpack.c.l.b16 %v1090
    %v1116 = vunpack.c.h.b16 %v1090
    %v1117 = vunpack.c.l.b16 %v1091
    %v1118 = vunpack.c.h.b16 %v1091
    %v1119 = vunpack.c.l.b16 %v1092
    %v1120 = vunpack.c.h.b16 %v1092
    %v1121 = vpack.c.b16 %v1107, %v1105
    %v1122 = vpack.c.b16 %v1108, %v1106
    %v1123 = vpack.c.b16 %v1111, %v1109
    %v1124 = vpack.c.b16 %v1112, %v1110
    %v1125 = vpack.c.b16 %v1115, %v1113
    %v1126 = vpack.c.b16 %v1116, %v1114
    %v1127 = vpack.c.b16 %v1119, %v1117
    %v1128 = vpack.c.b16 %v1120, %v1118
    %v1138 = vsel %vm930, 0, 0
    %1140 = vmatpush.bf16.msra.mxu0 0
    %1141 = vmatpush.bf16.msra.mxu0 0
    %1142 = vmatpush.bf16.msra.mxu0 0
    %1143 = vmatpush.bf16.msra.mxu0 0
    %1144 = vmatpush.bf16.msra.mxu0 %v1127
    %1145 = vmatpush.bf16.msra.mxu0 %v1125
    %1146 = vmatpush.bf16.msra.mxu0 %v1123
    %1147 = vmatpush.bf16.msra.mxu0 %v1121
    %1148 = vmatmul.bf16.gmra.mxu0 %v1138
    %v1149 = vpop.f32.mrf.mxu0
    %v1150 = vadd.f32 0.0, %v1149
    %v1151 = vpop.f32.mrf.mxu0
    %v1152 = vadd.f32 0.0, %v1151
    %1153 = vdwg.mxu0
    %1154 = vmatpush.bf16.msra.mxu0 0
    %1155 = vmatpush.bf16.msra.mxu0 0
    %1156 = vmatpush.bf16.msra.mxu0 0
    %1157 = vmatpush.bf16.msra.mxu0 0
    %1158 = vmatpush.bf16.msra.mxu0 %v1128
    %1159 = vmatpush.bf16.msra.mxu0 %v1126
    %1160 = vmatpush.bf16.msra.mxu0 %v1124
    %1161 = vmatpush.bf16.msra.mxu0 %v1122
    %1162 = vmatmul.bf16.gmra.mxu0 %v1138
    %v1163 = vpop.f32.mrf.mxu0
    %v1164 = vadd.f32 0.0, %v1163
    %v1165 = vpop.f32.mrf.mxu0
    %v1166 = vadd.f32 0.0, %v1165
    %1167 = vdwg.mxu0
    %v1168 = vadd.f32 %v1093, %v1150
    %v1169 = vadd.f32 %v1094, %v1164
    %v1170 = vadd.f32 %v1095, %v1152
    %v1171 = vadd.f32 %v1096, %v1166
    %v1172 = vxor.u32 %v1168, 2147483648
    %v1173 = vxor.u32 %v1169, 2147483648
    %v1174 = vxor.u32 %v1170, 2147483648
    %v1175 = vxor.u32 %v1171, 2147483648
    %v1176 = vmul.f32 %v1172, 1.442695
    %v1177 = vpow.pop %v1176
    %v1178 = vmul.f32 %v1173, 1.442695
    %v1179 = vpow.pop %v1178
    %v1180 = vmul.f32 %v1174, 1.442695
    %v1181 = vpow.pop %v1180
    %v1182 = vmul.f32 %v1175, 1.442695
    %v1183 = vpow.pop %v1182
    %v1184 = vadd.f32 %v1177, 1.0
    %v1185 = vadd.f32 %v1179, 1.0
    %v1186 = vadd.f32 %v1181, 1.0
    %v1187 = vadd.f32 %v1183, 1.0
    %v1188 = vrcp.pop %v1184
    %v1189 = vmul.f32 %v1184, %v1188
    %v1190 = vsub.f32 1.0, %v1189
    %v1191 = vmul.f32 %v1188, %v1190
    %v1192 = vadd.f32 %v1188, %v1191
    %vm1193 = vweird.f32 %v1184
    %vm1194 = vweird.f32 %v1188
    %vm1195 = vmor %vm1193, %vm1194
    %v1196 = vsel %vm1195, %v1188, %v1192
    %v1197 = vand.u32 2147483647, %v1184
    %vm1198 = vcmp.eq.f32.partialorder %v1197, 8.507059e+37
    %v1199 = vand.u32 %v1184, 2147483648
    %v1200 = vor.u32 1.1754944e-38, %v1199
    %v1201 = vsel %vm1198, %v1200, %v1196
    %v1202 = vmul.f32 1.0, %v1201
    %v1203 = vrcp.pop %v1185
    %v1204 = vmul.f32 %v1185, %v1203
    %v1205 = vsub.f32 1.0, %v1204
    %v1206 = vmul.f32 %v1203, %v1205
    %v1207 = vadd.f32 %v1203, %v1206
    %vm1208 = vweird.f32 %v1185
    %vm1209 = vweird.f32 %v1203
    %vm1210 = vmor %vm1208, %vm1209
    %v1211 = vsel %vm1210, %v1203, %v1207
    %v1212 = vand.u32 2147483647, %v1185
    %vm1213 = vcmp.eq.f32.partialorder %v1212, 8.507059e+37
    %v1214 = vand.u32 %v1185, 2147483648
    %v1215 = vor.u32 1.1754944e-38, %v1214
    %v1216 = vsel %vm1213, %v1215, %v1211
    %v1217 = vmul.f32 1.0, %v1216
    %v1218 = vrcp.pop %v1186
    %v1219 = vmul.f32 %v1186, %v1218
    %v1220 = vsub.f32 1.0, %v1219
    %v1221 = vmul.f32 %v1218, %v1220
    %v1222 = vadd.f32 %v1218, %v1221
    %vm1223 = vweird.f32 %v1186
    %vm1224 = vweird.f32 %v1218
    %vm1225 = vmor %vm1223, %vm1224
    %v1226 = vsel %vm1225, %v1218, %v1222
    %v1227 = vand.u32 2147483647, %v1186
    %vm1228 = vcmp.eq.f32.partialorder %v1227, 8.507059e+37
    %v1229 = vand.u32 %v1186, 2147483648
    %v1230 = vor.u32 1.1754944e-38, %v1229
    %v1231 = vsel %vm1228, %v1230, %v1226
    %v1232 = vmul.f32 1.0, %v1231
    %v1233 = vrcp.pop %v1187
    %v1234 = vmul.f32 %v1187, %v1233
    %v1235 = vsub.f32 1.0, %v1234
    %v1236 = vmul.f32 %v1233, %v1235
    %v1237 = vadd.f32 %v1233, %v1236
    %vm1238 = vweird.f32 %v1187
    %vm1239 = vweird.f32 %v1233
    %vm1240 = vmor %vm1238, %vm1239
    %v1241 = vsel %vm1240, %v1233, %v1237
    %v1242 = vand.u32 2147483647, %v1187
    %vm1243 = vcmp.eq.f32.partialorder %v1242, 8.507059e+37
    %v1244 = vand.u32 %v1187, 2147483648
    %v1245 = vor.u32 1.1754944e-38, %v1244
    %v1246 = vsel %vm1243, %v1245, %v1241
    %v1247 = vmul.f32 1.0, %v1246
    %v1248 = vtanh.pop %v1169
    %v1249 = vtanh.pop %v1171
    %v1250 = vmul.f32 %v1202, 0.0
    %v1251 = vmul.f32 %v1232, 0.0
    %1254 = vrot.lane.b32.xlu0 %v1248, 64
    %v1255 = vpop.permute.xlu0 %1254
    %1256 = vrot.lane.b32.xlu0 %v1249, 64
    %v1257 = vpop.permute.xlu0 %1256
    %v1260 = vmul.f32 %v1202, %v1255
    %v1261 = vmul.f32 %v1232, %v1257
    %1264 = vrot.lane.b32.xlu0 %v1260, 64
    %v1265 = vpop.permute.xlu0 %1264
    %1266 = vrot.lane.b32.xlu0 %v1261, 64
    %v1267 = vpop.permute.xlu0 %1266
    %v1270 = vadd.f32 %v1250, %v1265
    %v1271 = vadd.f32 %v1251, %v1267
    %v1272 = vtanh.pop %v1270
    %v1273 = vtanh.pop %v1271
    %1276 = vrot.lane.b32.xlu0 %v1272, 64
    %v1277 = vpop.permute.xlu0 %1276
    %1278 = vrot.lane.b32.xlu0 %v1273, 64
    %v1279 = vpop.permute.xlu0 %1278
    %v1282 = vmul.f32 %v1217, %v1277
    %v1283 = vmul.f32 %v1247, %v1279
    %s1284 = scalar_lea.vmem [#allocation2], 32
    %v1285 = vld [vmem:[%s1284] sm:$0xff]
    %v1286 = vld [vmem:[%s1284 + $0x8] sm:$0xff]
    %v1287 = vld [vmem:[%s1284 + $0x10] sm:$0xff]
    %v1288 = vld [vmem:[%s1284 + $0x18] sm:$0xff]
    %v1289 = vpack.c.bf16 %v1283, %v1282
    %v1291 = vsel %vm930, %v1289, 0
    %1293 = vmatpush.bf16.msra.mxu0 0
    %1294 = vmatpush.bf16.msra.mxu0 0
    %1295 = vmatpush.bf16.msra.mxu0 0
    %1296 = vmatpush.bf16.msra.mxu0 0
    %1297 = vmatpush.bf16.msra.mxu0 %v1127
    %1298 = vmatpush.bf16.msra.mxu0 %v1125
    %1299 = vmatpush.bf16.msra.mxu0 %v1123
    %1300 = vmatpush.bf16.msra.mxu0 %v1121
    %1301 = vmatmul.bf16.gmra.mxu0 %v1291
    %v1302 = vpop.f32.mrf.mxu0
    %v1303 = vadd.f32 0.0, %v1302
    %v1304 = vpop.f32.mrf.mxu0
    %v1305 = vadd.f32 0.0, %v1304
    %1306 = vdwg.mxu0
    %1307 = vmatpush.bf16.msra.mxu0 0
    %1308 = vmatpush.bf16.msra.mxu0 0
    %1309 = vmatpush.bf16.msra.mxu0 0
    %1310 = vmatpush.bf16.msra.mxu0 0
    %1311 = vmatpush.bf16.msra.mxu0 %v1128
    %1312 = vmatpush.bf16.msra.mxu0 %v1126
    %1313 = vmatpush.bf16.msra.mxu0 %v1124
    %1314 = vmatpush.bf16.msra.mxu0 %v1122
    %1315 = vmatmul.bf16.gmra.mxu0 %v1291
    %v1316 = vpop.f32.mrf.mxu0
    %v1317 = vadd.f32 0.0, %v1316
    %v1318 = vpop.f32.mrf.mxu0
    %v1319 = vadd.f32 0.0, %v1318
    %1320 = vdwg.mxu0
    %v1321 = vadd.f32 %v1285, %v1303
    %v1322 = vadd.f32 %v1286, %v1317
    %v1323 = vadd.f32 %v1287, %v1305
    %v1324 = vadd.f32 %v1288, %v1319
    %v1325 = vxor.u32 %v1321, 2147483648
    %v1326 = vxor.u32 %v1322, 2147483648
    %v1327 = vxor.u32 %v1323, 2147483648
    %v1328 = vxor.u32 %v1324, 2147483648
    %v1329 = vmul.f32 %v1325, 1.442695
    %v1330 = vpow.pop %v1329
    %v1331 = vmul.f32 %v1326, 1.442695
    %v1332 = vpow.pop %v1331
    %v1333 = vmul.f32 %v1327, 1.442695
    %v1334 = vpow.pop %v1333
    %v1335 = vmul.f32 %v1328, 1.442695
    %v1336 = vpow.pop %v1335
    %v1337 = vadd.f32 %v1330, 1.0
    %v1338 = vadd.f32 %v1332, 1.0
    %v1339 = vadd.f32 %v1334, 1.0
    %v1340 = vadd.f32 %v1336, 1.0
    %v1341 = vrcp.pop %v1337
    %v1342 = vmul.f32 %v1337, %v1341
    %v1343 = vsub.f32 1.0, %v1342
    %v1344 = vmul.f32 %v1341, %v1343
    %v1345 = vadd.f32 %v1341, %v1344
    %vm1346 = vweird.f32 %v1337
    %vm1347 = vweird.f32 %v1341
    %vm1348 = vmor %vm1346, %vm1347
    %v1349 = vsel %vm1348, %v1341, %v1345
    %v1350 = vand.u32 2147483647, %v1337
    %vm1351 = vcmp.eq.f32.partialorder %v1350, 8.507059e+37
    %v1352 = vand.u32 %v1337, 2147483648
    %v1353 = vor.u32 1.1754944e-38, %v1352
    %v1354 = vsel %vm1351, %v1353, %v1349
    %v1355 = vmul.f32 1.0, %v1354
    %v1356 = vrcp.pop %v1338
    %v1357 = vmul.f32 %v1338, %v1356
    %v1358 = vsub.f32 1.0, %v1357
    %v1359 = vmul.f32 %v1356, %v1358
    %v1360 = vadd.f32 %v1356, %v1359
    %vm1361 = vweird.f32 %v1338
    %vm1362 = vweird.f32 %v1356
    %vm1363 = vmor %vm1361, %vm1362
    %v1364 = vsel %vm1363, %v1356, %v1360
    %v1365 = vand.u32 2147483647, %v1338
    %vm1366 = vcmp.eq.f32.partialorder %v1365, 8.507059e+37
    %v1367 = vand.u32 %v1338, 2147483648
    %v1368 = vor.u32 1.1754944e-38, %v1367
    %v1369 = vsel %vm1366, %v1368, %v1364
    %v1370 = vmul.f32 1.0, %v1369
    %v1371 = vrcp.pop %v1339
    %v1372 = vmul.f32 %v1339, %v1371
    %v1373 = vsub.f32 1.0, %v1372
    %v1374 = vmul.f32 %v1371, %v1373
    %v1375 = vadd.f32 %v1371, %v1374
    %vm1376 = vweird.f32 %v1339
    %vm1377 = vweird.f32 %v1371
    %vm1378 = vmor %vm1376, %vm1377
    %v1379 = vsel %vm1378, %v1371, %v1375
    %v1380 = vand.u32 2147483647, %v1339
    %vm1381 = vcmp.eq.f32.partialorder %v1380, 8.507059e+37
    %v1382 = vand.u32 %v1339, 2147483648
    %v1383 = vor.u32 1.1754944e-38, %v1382
    %v1384 = vsel %vm1381, %v1383, %v1379
    %v1385 = vmul.f32 1.0, %v1384
    %v1386 = vrcp.pop %v1340
    %v1387 = vmul.f32 %v1340, %v1386
    %v1388 = vsub.f32 1.0, %v1387
    %v1389 = vmul.f32 %v1386, %v1388
    %v1390 = vadd.f32 %v1386, %v1389
    %vm1391 = vweird.f32 %v1340
    %vm1392 = vweird.f32 %v1386
    %vm1393 = vmor %vm1391, %vm1392
    %v1394 = vsel %vm1393, %v1386, %v1390
    %v1395 = vand.u32 2147483647, %v1340
    %vm1396 = vcmp.eq.f32.partialorder %v1395, 8.507059e+37
    %v1397 = vand.u32 %v1340, 2147483648
    %v1398 = vor.u32 1.1754944e-38, %v1397
    %v1399 = vsel %vm1396, %v1398, %v1394
    %v1400 = vmul.f32 1.0, %v1399
    %v1401 = vtanh.pop %v1322
    %v1402 = vtanh.pop %v1324
    %v1403 = vmul.f32 %v1355, %v1270
    %v1404 = vmul.f32 %v1385, %v1271
    %1407 = vrot.lane.b32.xlu0 %v1401, 64
    %v1408 = vpop.permute.xlu0 %1407
    %1409 = vrot.lane.b32.xlu0 %v1402, 64
    %v1410 = vpop.permute.xlu0 %1409
    %v1413 = vmul.f32 %v1355, %v1408
    %v1414 = vmul.f32 %v1385, %v1410
    %1417 = vrot.lane.b32.xlu0 %v1413, 64
    %v1418 = vpop.permute.xlu0 %1417
    %1419 = vrot.lane.b32.xlu0 %v1414, 64
    %v1420 = vpop.permute.xlu0 %1419
    %v1423 = vadd.f32 %v1403, %v1418
    %v1424 = vadd.f32 %v1404, %v1420
    %v1425 = vtanh.pop %v1423
    %v1426 = vtanh.pop %v1424
    %1429 = vrot.lane.b32.xlu0 %v1425, 64
    %v1430 = vpop.permute.xlu0 %1429
    %1431 = vrot.lane.b32.xlu0 %v1426, 64
    %v1432 = vpop.permute.xlu0 %1431
    %v1435 = vmul.f32 %v1370, %v1430
    %v1436 = vmul.f32 %v1400, %v1432
    %s1437 = scalar_lea.vmem [#allocation2], 64
    %v1438 = vld [vmem:[%s1437] sm:$0xff]
    %v1439 = vld [vmem:[%s1437 + $0x8] sm:$0xff]
    %v1440 = vld [vmem:[%s1437 + $0x10] sm:$0xff]
    %v1441 = vld [vmem:[%s1437 + $0x18] sm:$0xff]
    %v1442 = vpack.c.bf16 %v1436, %v1435
    %v1444 = vsel %vm930, %v1442, 0
    %1446 = vmatpush.bf16.msra.mxu0 0
    %1447 = vmatpush.bf16.msra.mxu0 0
    %1448 = vmatpush.bf16.msra.mxu0 0
    %1449 = vmatpush.bf16.msra.mxu0 0
    %1450 = vmatpush.bf16.msra.mxu0 %v1127
    %1451 = vmatpush.bf16.msra.mxu0 %v1125
    %1452 = vmatpush.bf16.msra.mxu0 %v1123
    %1453 = vmatpush.bf16.msra.mxu0 %v1121
    %1454 = vmatmul.bf16.gmra.mxu0 %v1444
    %v1455 = vpop.f32.mrf.mxu0
    %v1456 = vadd.f32 0.0, %v1455
    %v1457 = vpop.f32.mrf.mxu0
    %v1458 = vadd.f32 0.0, %v1457
    %1459 = vdwg.mxu0
    %1460 = vmatpush.bf16.msra.mxu0 0
    %1461 = vmatpush.bf16.msra.mxu0 0
    %1462 = vmatpush.bf16.msra.mxu0 0
    %1463 = vmatpush.bf16.msra.mxu0 0
    %1464 = vmatpush.bf16.msra.mxu0 %v1128
    %1465 = vmatpush.bf16.msra.mxu0 %v1126
    %1466 = vmatpush.bf16.msra.mxu0 %v1124
    %1467 = vmatpush.bf16.msra.mxu0 %v1122
    %1468 = vmatmul.bf16.gmra.mxu0 %v1444
    %v1469 = vpop.f32.mrf.mxu0
    %v1470 = vadd.f32 0.0, %v1469
    %v1471 = vpop.f32.mrf.mxu0
    %v1472 = vadd.f32 0.0, %v1471
    %1473 = vdwg.mxu0
    %v1474 = vadd.f32 %v1438, %v1456
    %v1475 = vadd.f32 %v1439, %v1470
    %v1476 = vadd.f32 %v1440, %v1458
    %v1477 = vadd.f32 %v1441, %v1472
    %v1478 = vxor.u32 %v1474, 2147483648
    %v1479 = vxor.u32 %v1475, 2147483648
    %v1480 = vxor.u32 %v1476, 2147483648
    %v1481 = vxor.u32 %v1477, 2147483648
    %v1482 = vmul.f32 %v1478, 1.442695
    %v1483 = vpow.pop %v1482
    %v1484 = vmul.f32 %v1479, 1.442695
    %v1485 = vpow.pop %v1484
    %v1486 = vmul.f32 %v1480, 1.442695
    %v1487 = vpow.pop %v1486
    %v1488 = vmul.f32 %v1481, 1.442695
    %v1489 = vpow.pop %v1488
    %v1490 = vadd.f32 %v1483, 1.0
    %v1491 = vadd.f32 %v1485, 1.0
    %v1492 = vadd.f32 %v1487, 1.0
    %v1493 = vadd.f32 %v1489, 1.0
    %v1494 = vrcp.pop %v1490
    %v1495 = vmul.f32 %v1490, %v1494
    %v1496 = vsub.f32 1.0, %v1495
    %v1497 = vmul.f32 %v1494, %v1496
    %v1498 = vadd.f32 %v1494, %v1497
    %vm1499 = vweird.f32 %v1490
    %vm1500 = vweird.f32 %v1494
    %vm1501 = vmor %vm1499, %vm1500
    %v1502 = vsel %vm1501, %v1494, %v1498
    %v1503 = vand.u32 2147483647, %v1490
    %vm1504 = vcmp.eq.f32.partialorder %v1503, 8.507059e+37
    %v1505 = vand.u32 %v1490, 2147483648
    %v1506 = vor.u32 1.1754944e-38, %v1505
    %v1507 = vsel %vm1504, %v1506, %v1502
    %v1508 = vmul.f32 1.0, %v1507
    %v1509 = vrcp.pop %v1491
    %v1510 = vmul.f32 %v1491, %v1509
    %v1511 = vsub.f32 1.0, %v1510
    %v1512 = vmul.f32 %v1509, %v1511
    %v1513 = vadd.f32 %v1509, %v1512
    %vm1514 = vweird.f32 %v1491
    %vm1515 = vweird.f32 %v1509
    %vm1516 = vmor %vm1514, %vm1515
    %v1517 = vsel %vm1516, %v1509, %v1513
    %v1518 = vand.u32 2147483647, %v1491
    %vm1519 = vcmp.eq.f32.partialorder %v1518, 8.507059e+37
    %v1520 = vand.u32 %v1491, 2147483648
    %v1521 = vor.u32 1.1754944e-38, %v1520
    %v1522 = vsel %vm1519, %v1521, %v1517
    %v1523 = vmul.f32 1.0, %v1522
    %v1524 = vrcp.pop %v1492
    %v1525 = vmul.f32 %v1492, %v1524
    %v1526 = vsub.f32 1.0, %v1525
    %v1527 = vmul.f32 %v1524, %v1526
    %v1528 = vadd.f32 %v1524, %v1527
    %vm1529 = vweird.f32 %v1492
    %vm1530 = vweird.f32 %v1524
    %vm1531 = vmor %vm1529, %vm1530
    %v1532 = vsel %vm1531, %v1524, %v1528
    %v1533 = vand.u32 2147483647, %v1492
    %vm1534 = vcmp.eq.f32.partialorder %v1533, 8.507059e+37
    %v1535 = vand.u32 %v1492, 2147483648
    %v1536 = vor.u32 1.1754944e-38, %v1535
    %v1537 = vsel %vm1534, %v1536, %v1532
    %v1538 = vmul.f32 1.0, %v1537
    %v1539 = vrcp.pop %v1493
    %v1540 = vmul.f32 %v1493, %v1539
    %v1541 = vsub.f32 1.0, %v1540
    %v1542 = vmul.f32 %v1539, %v1541
    %v1543 = vadd.f32 %v1539, %v1542
    %vm1544 = vweird.f32 %v1493
    %vm1545 = vweird.f32 %v1539
    %vm1546 = vmor %vm1544, %vm1545
    %v1547 = vsel %vm1546, %v1539, %v1543
    %v1548 = vand.u32 2147483647, %v1493
    %vm1549 = vcmp.eq.f32.partialorder %v1548, 8.507059e+37
    %v1550 = vand.u32 %v1493, 2147483648
    %v1551 = vor.u32 1.1754944e-38, %v1550
    %v1552 = vsel %vm1549, %v1551, %v1547
    %v1553 = vmul.f32 1.0, %v1552
    %v1554 = vtanh.pop %v1475
    %v1555 = vtanh.pop %v1477
    %v1556 = vmul.f32 %v1508, %v1423
    %v1557 = vmul.f32 %v1538, %v1424
    %1560 = vrot.lane.b32.xlu0 %v1554, 64
    %v1561 = vpop.permute.xlu0 %1560
    %1562 = vrot.lane.b32.xlu0 %v1555, 64
    %v1563 = vpop.permute.xlu0 %1562
    %v1566 = vmul.f32 %v1508, %v1561
    %v1567 = vmul.f32 %v1538, %v1563
    %1570 = vrot.lane.b32.xlu0 %v1566, 64
    %v1571 = vpop.permute.xlu0 %1570
    %1572 = vrot.lane.b32.xlu0 %v1567, 64
    %v1573 = vpop.permute.xlu0 %1572
    %v1576 = vadd.f32 %v1556, %v1571
    %v1577 = vadd.f32 %v1557, %v1573
    %v1578 = vtanh.pop %v1576
    %v1579 = vtanh.pop %v1577
    %1582 = vrot.lane.b32.xlu0 %v1578, 64
    %v1583 = vpop.permute.xlu0 %1582
    %1584 = vrot.lane.b32.xlu0 %v1579, 64
    %v1585 = vpop.permute.xlu0 %1584
    %v1588 = vmul.f32 %v1523, %v1583
    %v1589 = vmul.f32 %v1553, %v1585
    %s1590 = scalar_lea.vmem [#allocation2], 96
    %v1591 = vld [vmem:[%s1590] sm:$0xff]
    %v1592 = vld [vmem:[%s1590 + $0x8] sm:$0xff]
    %v1593 = vld [vmem:[%s1590 + $0x10] sm:$0xff]
    %v1594 = vld [vmem:[%s1590 + $0x18] sm:$0xff]
    %v1595 = vpack.c.bf16 %v1589, %v1588
    %v1597 = vsel %vm930, %v1595, 0
    %1599 = vmatpush.bf16.msra.mxu0 0
    %1600 = vmatpush.bf16.msra.mxu0 0
    %1601 = vmatpush.bf16.msra.mxu0 0
    %1602 = vmatpush.bf16.msra.mxu0 0
    %1603 = vmatpush.bf16.msra.mxu0 %v1127
    %1604 = vmatpush.bf16.msra.mxu0 %v1125
    %1605 = vmatpush.bf16.msra.mxu0 %v1123
    %1606 = vmatpush.bf16.msra.mxu0 %v1121
    %1607 = vmatmul.bf16.gmra.mxu0 %v1597
    %v1608 = vpop.f32.mrf.mxu0
    %v1609 = vadd.f32 0.0, %v1608
    %v1610 = vpop.f32.mrf.mxu0
    %v1611 = vadd.f32 0.0, %v1610
    %1612 = vdwg.mxu0
    %1613 = vmatpush.bf16.msra.mxu0 0
    %1614 = vmatpush.bf16.msra.mxu0 0
    %1615 = vmatpush.bf16.msra.mxu0 0
    %1616 = vmatpush.bf16.msra.mxu0 0
    %1617 = vmatpush.bf16.msra.mxu0 %v1128
    %1618 = vmatpush.bf16.msra.mxu0 %v1126
    %1619 = vmatpush.bf16.msra.mxu0 %v1124
    %1620 = vmatpush.bf16.msra.mxu0 %v1122
    %1621 = vmatmul.bf16.gmra.mxu0 %v1597
    %v1622 = vpop.f32.mrf.mxu0
    %v1623 = vadd.f32 0.0, %v1622
    %v1624 = vpop.f32.mrf.mxu0
    %v1625 = vadd.f32 0.0, %v1624
    %1626 = vdwg.mxu0
    %v1627 = vadd.f32 %v1591, %v1609
    %v1628 = vadd.f32 %v1592, %v1623
    %v1629 = vadd.f32 %v1593, %v1611
    %v1630 = vadd.f32 %v1594, %v1625
    %v1631 = vxor.u32 %v1627, 2147483648
    %v1632 = vxor.u32 %v1628, 2147483648
    %v1633 = vxor.u32 %v1629, 2147483648
    %v1634 = vxor.u32 %v1630, 2147483648
    %v1635 = vmul.f32 %v1631, 1.442695
    %v1636 = vpow.pop %v1635
    %v1637 = vmul.f32 %v1632, 1.442695
    %v1638 = vpow.pop %v1637
    %v1639 = vmul.f32 %v1633, 1.442695
    %v1640 = vpow.pop %v1639
    %v1641 = vmul.f32 %v1634, 1.442695
    %v1642 = vpow.pop %v1641
    %v1643 = vadd.f32 %v1636, 1.0
    %v1644 = vadd.f32 %v1638, 1.0
    %v1645 = vadd.f32 %v1640, 1.0
    %v1646 = vadd.f32 %v1642, 1.0
    %v1647 = vrcp.pop %v1643
    %v1648 = vmul.f32 %v1643, %v1647
    %v1649 = vsub.f32 1.0, %v1648
    %v1650 = vmul.f32 %v1647, %v1649
    %v1651 = vadd.f32 %v1647, %v1650
    %vm1652 = vweird.f32 %v1643
    %vm1653 = vweird.f32 %v1647
    %vm1654 = vmor %vm1652, %vm1653
    %v1655 = vsel %vm1654, %v1647, %v1651
    %v1656 = vand.u32 2147483647, %v1643
    %vm1657 = vcmp.eq.f32.partialorder %v1656, 8.507059e+37
    %v1658 = vand.u32 %v1643, 2147483648
    %v1659 = vor.u32 1.1754944e-38, %v1658
    %v1660 = vsel %vm1657, %v1659, %v1655
    %v1661 = vmul.f32 1.0, %v1660
    %v1662 = vrcp.pop %v1644
    %v1663 = vmul.f32 %v1644, %v1662
    %v1664 = vsub.f32 1.0, %v1663
    %v1665 = vmul.f32 %v1662, %v1664
    %v1666 = vadd.f32 %v1662, %v1665
    %vm1667 = vweird.f32 %v1644
    %vm1668 = vweird.f32 %v1662
    %vm1669 = vmor %vm1667, %vm1668
    %v1670 = vsel %vm1669, %v1662, %v1666
    %v1671 = vand.u32 2147483647, %v1644
    %vm1672 = vcmp.eq.f32.partialorder %v1671, 8.507059e+37
    %v1673 = vand.u32 %v1644, 2147483648
    %v1674 = vor.u32 1.1754944e-38, %v1673
    %v1675 = vsel %vm1672, %v1674, %v1670
    %v1676 = vmul.f32 1.0, %v1675
    %v1677 = vrcp.pop %v1645
    %v1678 = vmul.f32 %v1645, %v1677
    %v1679 = vsub.f32 1.0, %v1678
    %v1680 = vmul.f32 %v1677, %v1679
    %v1681 = vadd.f32 %v1677, %v1680
    %vm1682 = vweird.f32 %v1645
    %vm1683 = vweird.f32 %v1677
    %vm1684 = vmor %vm1682, %vm1683
    %v1685 = vsel %vm1684, %v1677, %v1681
    %v1686 = vand.u32 2147483647, %v1645
    %vm1687 = vcmp.eq.f32.partialorder %v1686, 8.507059e+37
    %v1688 = vand.u32 %v1645, 2147483648
    %v1689 = vor.u32 1.1754944e-38, %v1688
    %v1690 = vsel %vm1687, %v1689, %v1685
    %v1691 = vmul.f32 1.0, %v1690
    %v1692 = vrcp.pop %v1646
    %v1693 = vmul.f32 %v1646, %v1692
    %v1694 = vsub.f32 1.0, %v1693
    %v1695 = vmul.f32 %v1692, %v1694
    %v1696 = vadd.f32 %v1692, %v1695
    %vm1697 = vweird.f32 %v1646
    %vm1698 = vweird.f32 %v1692
    %vm1699 = vmor %vm1697, %vm1698
    %v1700 = vsel %vm1699, %v1692, %v1696
    %v1701 = vand.u32 2147483647, %v1646
    %vm1702 = vcmp.eq.f32.partialorder %v1701, 8.507059e+37
    %v1703 = vand.u32 %v1646, 2147483648
    %v1704 = vor.u32 1.1754944e-38, %v1703
    %v1705 = vsel %vm1702, %v1704, %v1700
    %v1706 = vmul.f32 1.0, %v1705
    %v1707 = vtanh.pop %v1628
    %v1708 = vtanh.pop %v1630
    %v1709 = vmul.f32 %v1661, %v1576
    %v1710 = vmul.f32 %v1691, %v1577
    %1713 = vrot.lane.b32.xlu0 %v1707, 64
    %v1714 = vpop.permute.xlu0 %1713
    %1715 = vrot.lane.b32.xlu0 %v1708, 64
    %v1716 = vpop.permute.xlu0 %1715
    %v1719 = vmul.f32 %v1661, %v1714
    %v1720 = vmul.f32 %v1691, %v1716
    %1723 = vrot.lane.b32.xlu0 %v1719, 64
    %v1724 = vpop.permute.xlu0 %1723
    %1725 = vrot.lane.b32.xlu0 %v1720, 64
    %v1726 = vpop.permute.xlu0 %1725
    %v1729 = vadd.f32 %v1709, %v1724
    %v1730 = vadd.f32 %v1710, %v1726
    %v1731 = vtanh.pop %v1729
    %v1732 = vtanh.pop %v1730
    %1735 = vrot.lane.b32.xlu0 %v1731, 64
    %v1736 = vpop.permute.xlu0 %1735
    %1737 = vrot.lane.b32.xlu0 %v1732, 64
    %v1738 = vpop.permute.xlu0 %1737
    %v1741 = vmul.f32 %v1676, %v1736
    %v1742 = vmul.f32 %v1706, %v1738
    %s1743 = scalar_lea.vmem [#allocation2], 128
    %v1744 = vld [vmem:[%s1743] sm:$0xff]
    %v1745 = vld [vmem:[%s1743 + $0x8] sm:$0xff]
    %v1746 = vld [vmem:[%s1743 + $0x10] sm:$0xff]
    %v1747 = vld [vmem:[%s1743 + $0x18] sm:$0xff]
    %v1748 = vpack.c.bf16 %v1742, %v1741
    %v1750 = vsel %vm930, %v1748, 0
    %1752 = vmatpush.bf16.msra.mxu0 0
    %1753 = vmatpush.bf16.msra.mxu0 0
    %1754 = vmatpush.bf16.msra.mxu0 0
    %1755 = vmatpush.bf16.msra.mxu0 0
    %1756 = vmatpush.bf16.msra.mxu0 %v1127
    %1757 = vmatpush.bf16.msra.mxu0 %v1125
    %1758 = vmatpush.bf16.msra.mxu0 %v1123
    %1759 = vmatpush.bf16.msra.mxu0 %v1121
    %1760 = vmatmul.bf16.gmra.mxu0 %v1750
    %v1761 = vpop.f32.mrf.mxu0
    %v1762 = vadd.f32 0.0, %v1761
    %v1763 = vpop.f32.mrf.mxu0
    %v1764 = vadd.f32 0.0, %v1763
    %1765 = vdwg.mxu0
    %1766 = vmatpush.bf16.msra.mxu0 0
    %1767 = vmatpush.bf16.msra.mxu0 0
    %1768 = vmatpush.bf16.msra.mxu0 0
    %1769 = vmatpush.bf16.msra.mxu0 0
    %1770 = vmatpush.bf16.msra.mxu0 %v1128
    %1771 = vmatpush.bf16.msra.mxu0 %v1126
    %1772 = vmatpush.bf16.msra.mxu0 %v1124
    %1773 = vmatpush.bf16.msra.mxu0 %v1122
    %1774 = vmatmul.bf16.gmra.mxu0 %v1750
    %v1775 = vpop.f32.mrf.mxu0
    %v1776 = vadd.f32 0.0, %v1775
    %v1777 = vpop.f32.mrf.mxu0
    %v1778 = vadd.f32 0.0, %v1777
    %1779 = vdwg.mxu0
    %v1780 = vadd.f32 %v1744, %v1762
    %v1781 = vadd.f32 %v1745, %v1776
    %v1782 = vadd.f32 %v1746, %v1764
    %v1783 = vadd.f32 %v1747, %v1778
    %v1784 = vxor.u32 %v1780, 2147483648
    %v1785 = vxor.u32 %v1781, 2147483648
    %v1786 = vxor.u32 %v1782, 2147483648
    %v1787 = vxor.u32 %v1783, 2147483648
    %v1788 = vmul.f32 %v1784, 1.442695
    %v1789 = vpow.pop %v1788
    %v1790 = vmul.f32 %v1785, 1.442695
    %v1791 = vpow.pop %v1790
    %v1792 = vmul.f32 %v1786, 1.442695
    %v1793 = vpow.pop %v1792
    %v1794 = vmul.f32 %v1787, 1.442695
    %v1795 = vpow.pop %v1794
    %v1796 = vadd.f32 %v1789, 1.0
    %v1797 = vadd.f32 %v1791, 1.0
    %v1798 = vadd.f32 %v1793, 1.0
    %v1799 = vadd.f32 %v1795, 1.0
    %v1800 = vrcp.pop %v1796
    %v1801 = vmul.f32 %v1796, %v1800
    %v1802 = vsub.f32 1.0, %v1801
    %v1803 = vmul.f32 %v1800, %v1802
    %v1804 = vadd.f32 %v1800, %v1803
    %vm1805 = vweird.f32 %v1796
    %vm1806 = vweird.f32 %v1800
    %vm1807 = vmor %vm1805, %vm1806
    %v1808 = vsel %vm1807, %v1800, %v1804
    %v1809 = vand.u32 2147483647, %v1796
    %vm1810 = vcmp.eq.f32.partialorder %v1809, 8.507059e+37
    %v1811 = vand.u32 %v1796, 2147483648
    %v1812 = vor.u32 1.1754944e-38, %v1811
    %v1813 = vsel %vm1810, %v1812, %v1808
    %v1814 = vmul.f32 1.0, %v1813
    %v1815 = vrcp.pop %v1797
    %v1816 = vmul.f32 %v1797, %v1815
    %v1817 = vsub.f32 1.0, %v1816
    %v1818 = vmul.f32 %v1815, %v1817
    %v1819 = vadd.f32 %v1815, %v1818
    %vm1820 = vweird.f32 %v1797
    %vm1821 = vweird.f32 %v1815
    %vm1822 = vmor %vm1820, %vm1821
    %v1823 = vsel %vm1822, %v1815, %v1819
    %v1824 = vand.u32 2147483647, %v1797
    %vm1825 = vcmp.eq.f32.partialorder %v1824, 8.507059e+37
    %v1826 = vand.u32 %v1797, 2147483648
    %v1827 = vor.u32 1.1754944e-38, %v1826
    %v1828 = vsel %vm1825, %v1827, %v1823
    %v1829 = vmul.f32 1.0, %v1828
    %v1830 = vrcp.pop %v1798
    %v1831 = vmul.f32 %v1798, %v1830
    %v1832 = vsub.f32 1.0, %v1831
    %v1833 = vmul.f32 %v1830, %v1832
    %v1834 = vadd.f32 %v1830, %v1833
    %vm1835 = vweird.f32 %v1798
    %vm1836 = vweird.f32 %v1830
    %vm1837 = vmor %vm1835, %vm1836
    %v1838 = vsel %vm1837, %v1830, %v1834
    %v1839 = vand.u32 2147483647, %v1798
    %vm1840 = vcmp.eq.f32.partialorder %v1839, 8.507059e+37
    %v1841 = vand.u32 %v1798, 2147483648
    %v1842 = vor.u32 1.1754944e-38, %v1841
    %v1843 = vsel %vm1840, %v1842, %v1838
    %v1844 = vmul.f32 1.0, %v1843
    %v1845 = vrcp.pop %v1799
    %v1846 = vmul.f32 %v1799, %v1845
    %v1847 = vsub.f32 1.0, %v1846
    %v1848 = vmul.f32 %v1845, %v1847
    %v1849 = vadd.f32 %v1845, %v1848
    %vm1850 = vweird.f32 %v1799
    %vm1851 = vweird.f32 %v1845
    %vm1852 = vmor %vm1850, %vm1851
    %v1853 = vsel %vm1852, %v1845, %v1849
    %v1854 = vand.u32 2147483647, %v1799
    %vm1855 = vcmp.eq.f32.partialorder %v1854, 8.507059e+37
    %v1856 = vand.u32 %v1799, 2147483648
    %v1857 = vor.u32 1.1754944e-38, %v1856
    %v1858 = vsel %vm1855, %v1857, %v1853
    %v1859 = vmul.f32 1.0, %v1858
    %v1860 = vtanh.pop %v1781
    %v1861 = vtanh.pop %v1783
    %v1862 = vmul.f32 %v1814, %v1729
    %v1863 = vmul.f32 %v1844, %v1730
    %1866 = vrot.lane.b32.xlu0 %v1860, 64
    %v1867 = vpop.permute.xlu0 %1866
    %1868 = vrot.lane.b32.xlu0 %v1861, 64
    %v1869 = vpop.permute.xlu0 %1868
    %v1872 = vmul.f32 %v1814, %v1867
    %v1873 = vmul.f32 %v1844, %v1869
    %1876 = vrot.lane.b32.xlu0 %v1872, 64
    %v1877 = vpop.permute.xlu0 %1876
    %1878 = vrot.lane.b32.xlu0 %v1873, 64
    %v1879 = vpop.permute.xlu0 %1878
    %v1882 = vadd.f32 %v1862, %v1877
    %v1883 = vadd.f32 %v1863, %v1879
    %v1884 = vtanh.pop %v1882
    %v1885 = vtanh.pop %v1883
    %1888 = vrot.lane.b32.xlu0 %v1884, 64
    %v1889 = vpop.permute.xlu0 %1888
    %1890 = vrot.lane.b32.xlu0 %v1885, 64
    %v1891 = vpop.permute.xlu0 %1890
    %v1894 = vmul.f32 %v1829, %v1889
    %v1895 = vmul.f32 %v1859, %v1891
    %s1896 = scalar_lea.vmem [#allocation2], 160
    %v1897 = vld [vmem:[%s1896] sm:$0xff]
    %v1898 = vld [vmem:[%s1896 + $0x8] sm:$0xff]
    %v1899 = vld [vmem:[%s1896 + $0x10] sm:$0xff]
    %v1900 = vld [vmem:[%s1896 + $0x18] sm:$0xff]
    %v1901 = vpack.c.bf16 %v1895, %v1894
    %v1903 = vsel %vm930, %v1901, 0
    %1905 = vmatpush.bf16.msra.mxu0 0
    %1906 = vmatpush.bf16.msra.mxu0 0
    %1907 = vmatpush.bf16.msra.mxu0 0
    %1908 = vmatpush.bf16.msra.mxu0 0
    %1909 = vmatpush.bf16.msra.mxu0 %v1127
    %1910 = vmatpush.bf16.msra.mxu0 %v1125
    %1911 = vmatpush.bf16.msra.mxu0 %v1123
    %1912 = vmatpush.bf16.msra.mxu0 %v1121
    %1913 = vmatmul.bf16.gmra.mxu0 %v1903
    %v1914 = vpop.f32.mrf.mxu0
    %v1915 = vadd.f32 0.0, %v1914
    %v1916 = vpop.f32.mrf.mxu0
    %v1917 = vadd.f32 0.0, %v1916
    %1918 = vdwg.mxu0
    %1919 = vmatpush.bf16.msra.mxu0 0
    %1920 = vmatpush.bf16.msra.mxu0 0
    %1921 = vmatpush.bf16.msra.mxu0 0
    %1922 = vmatpush.bf16.msra.mxu0 0
    %1923 = vmatpush.bf16.msra.mxu0 %v1128
    %1924 = vmatpush.bf16.msra.mxu0 %v1126
    %1925 = vmatpush.bf16.msra.mxu0 %v1124
    %1926 = vmatpush.bf16.msra.mxu0 %v1122
    %1927 = vmatmul.bf16.gmra.mxu0 %v1903
    %v1928 = vpop.f32.mrf.mxu0
    %v1929 = vadd.f32 0.0, %v1928
    %v1930 = vpop.f32.mrf.mxu0
    %v1931 = vadd.f32 0.0, %v1930
    %1932 = vdwg.mxu0
    %v1933 = vadd.f32 %v1897, %v1915
    %v1934 = vadd.f32 %v1898, %v1929
    %v1935 = vadd.f32 %v1899, %v1917
    %v1936 = vadd.f32 %v1900, %v1931
    %v1937 = vxor.u32 %v1933, 2147483648
    %v1938 = vxor.u32 %v1934, 2147483648
    %v1939 = vxor.u32 %v1935, 2147483648
    %v1940 = vxor.u32 %v1936, 2147483648
    %v1941 = vmul.f32 %v1937, 1.442695
    %v1942 = vpow.pop %v1941
    %v1943 = vmul.f32 %v1938, 1.442695
    %v1944 = vpow.pop %v1943
    %v1945 = vmul.f32 %v1939, 1.442695
    %v1946 = vpow.pop %v1945
    %v1947 = vmul.f32 %v1940, 1.442695
    %v1948 = vpow.pop %v1947
    %v1949 = vadd.f32 %v1942, 1.0
    %v1950 = vadd.f32 %v1944, 1.0
    %v1951 = vadd.f32 %v1946, 1.0
    %v1952 = vadd.f32 %v1948, 1.0
    %v1953 = vrcp.pop %v1949
    %v1954 = vmul.f32 %v1949, %v1953
    %v1955 = vsub.f32 1.0, %v1954
    %v1956 = vmul.f32 %v1953, %v1955
    %v1957 = vadd.f32 %v1953, %v1956
    %vm1958 = vweird.f32 %v1949
    %vm1959 = vweird.f32 %v1953
    %vm1960 = vmor %vm1958, %vm1959
    %v1961 = vsel %vm1960, %v1953, %v1957
    %v1962 = vand.u32 2147483647, %v1949
    %vm1963 = vcmp.eq.f32.partialorder %v1962, 8.507059e+37
    %v1964 = vand.u32 %v1949, 2147483648
    %v1965 = vor.u32 1.1754944e-38, %v1964
    %v1966 = vsel %vm1963, %v1965, %v1961
    %v1967 = vmul.f32 1.0, %v1966
    %v1968 = vrcp.pop %v1950
    %v1969 = vmul.f32 %v1950, %v1968
    %v1970 = vsub.f32 1.0, %v1969
    %v1971 = vmul.f32 %v1968, %v1970
    %v1972 = vadd.f32 %v1968, %v1971
    %vm1973 = vweird.f32 %v1950
    %vm1974 = vweird.f32 %v1968
    %vm1975 = vmor %vm1973, %vm1974
    %v1976 = vsel %vm1975, %v1968, %v1972
    %v1977 = vand.u32 2147483647, %v1950
    %vm1978 = vcmp.eq.f32.partialorder %v1977, 8.507059e+37
    %v1979 = vand.u32 %v1950, 2147483648
    %v1980 = vor.u32 1.1754944e-38, %v1979
    %v1981 = vsel %vm1978, %v1980, %v1976
    %v1982 = vmul.f32 1.0, %v1981
    %v1983 = vrcp.pop %v1951
    %v1984 = vmul.f32 %v1951, %v1983
    %v1985 = vsub.f32 1.0, %v1984
    %v1986 = vmul.f32 %v1983, %v1985
    %v1987 = vadd.f32 %v1983, %v1986
    %vm1988 = vweird.f32 %v1951
    %vm1989 = vweird.f32 %v1983
    %vm1990 = vmor %vm1988, %vm1989
    %v1991 = vsel %vm1990, %v1983, %v1987
    %v1992 = vand.u32 2147483647, %v1951
    %vm1993 = vcmp.eq.f32.partialorder %v1992, 8.507059e+37
    %v1994 = vand.u32 %v1951, 2147483648
    %v1995 = vor.u32 1.1754944e-38, %v1994
    %v1996 = vsel %vm1993, %v1995, %v1991
    %v1997 = vmul.f32 1.0, %v1996
    %v1998 = vrcp.pop %v1952
    %v1999 = vmul.f32 %v1952, %v1998
    %v2000 = vsub.f32 1.0, %v1999
    %v2001 = vmul.f32 %v1998, %v2000
    %v2002 = vadd.f32 %v1998, %v2001
    %vm2003 = vweird.f32 %v1952
    %vm2004 = vweird.f32 %v1998
    %vm2005 = vmor %vm2003, %vm2004
    %v2006 = vsel %vm2005, %v1998, %v2002
    %v2007 = vand.u32 2147483647, %v1952
    %vm2008 = vcmp.eq.f32.partialorder %v2007, 8.507059e+37
    %v2009 = vand.u32 %v1952, 2147483648
    %v2010 = vor.u32 1.1754944e-38, %v2009
    %v2011 = vsel %vm2008, %v2010, %v2006
    %v2012 = vmul.f32 1.0, %v2011
    %v2013 = vtanh.pop %v1934
    %v2014 = vtanh.pop %v1936
    %v2015 = vmul.f32 %v1967, %v1882
    %v2016 = vmul.f32 %v1997, %v1883
    %2019 = vrot.lane.b32.xlu0 %v2013, 64
    %v2020 = vpop.permute.xlu0 %2019
    %2021 = vrot.lane.b32.xlu0 %v2014, 64
    %v2022 = vpop.permute.xlu0 %2021
    %v2025 = vmul.f32 %v1967, %v2020
    %v2026 = vmul.f32 %v1997, %v2022
    %2029 = vrot.lane.b32.xlu0 %v2025, 64
    %v2030 = vpop.permute.xlu0 %2029
    %2031 = vrot.lane.b32.xlu0 %v2026, 64
    %v2032 = vpop.permute.xlu0 %2031
    %v2035 = vadd.f32 %v2015, %v2030
    %v2036 = vadd.f32 %v2016, %v2032
    %v2037 = vtanh.pop %v2035
    %v2038 = vtanh.pop %v2036
    %2041 = vrot.lane.b32.xlu0 %v2037, 64
    %v2042 = vpop.permute.xlu0 %2041
    %2043 = vrot.lane.b32.xlu0 %v2038, 64
    %v2044 = vpop.permute.xlu0 %2043
    %v2047 = vmul.f32 %v1982, %v2042
    %v2048 = vmul.f32 %v2012, %v2044
    %s2049 = scalar_lea.vmem [#allocation2], 192
    %v2050 = vld [vmem:[%s2049] sm:$0xff]
    %v2051 = vld [vmem:[%s2049 + $0x8] sm:$0xff]
    %v2052 = vld [vmem:[%s2049 + $0x10] sm:$0xff]
    %v2053 = vld [vmem:[%s2049 + $0x18] sm:$0xff]
    %v2054 = vpack.c.bf16 %v2048, %v2047
    %v2056 = vsel %vm930, %v2054, 0
    %2058 = vmatpush.bf16.msra.mxu0 0
    %2059 = vmatpush.bf16.msra.mxu0 0
    %2060 = vmatpush.bf16.msra.mxu0 0
    %2061 = vmatpush.bf16.msra.mxu0 0
    %2062 = vmatpush.bf16.msra.mxu0 %v1127
    %2063 = vmatpush.bf16.msra.mxu0 %v1125
    %2064 = vmatpush.bf16.msra.mxu0 %v1123
    %2065 = vmatpush.bf16.msra.mxu0 %v1121
    %2066 = vmatmul.bf16.gmra.mxu0 %v2056
    %v2067 = vpop.f32.mrf.mxu0
    %v2068 = vadd.f32 0.0, %v2067
    %v2069 = vpop.f32.mrf.mxu0
    %v2070 = vadd.f32 0.0, %v2069
    %2071 = vdwg.mxu0
    %2072 = vmatpush.bf16.msra.mxu0 0
    %2073 = vmatpush.bf16.msra.mxu0 0
    %2074 = vmatpush.bf16.msra.mxu0 0
    %2075 = vmatpush.bf16.msra.mxu0 0
    %2076 = vmatpush.bf16.msra.mxu0 %v1128
    %2077 = vmatpush.bf16.msra.mxu0 %v1126
    %2078 = vmatpush.bf16.msra.mxu0 %v1124
    %2079 = vmatpush.bf16.msra.mxu0 %v1122
    %2080 = vmatmul.bf16.gmra.mxu0 %v2056
    %v2081 = vpop.f32.mrf.mxu0
    %v2082 = vadd.f32 0.0, %v2081
    %v2083 = vpop.f32.mrf.mxu0
    %v2084 = vadd.f32 0.0, %v2083
    %2085 = vdwg.mxu0
    %v2086 = vadd.f32 %v2050, %v2068
    %v2087 = vadd.f32 %v2051, %v2082
    %v2088 = vadd.f32 %v2052, %v2070
    %v2089 = vadd.f32 %v2053, %v2084
    %v2090 = vxor.u32 %v2086, 2147483648
    %v2091 = vxor.u32 %v2087, 2147483648
    %v2092 = vxor.u32 %v2088, 2147483648
    %v2093 = vxor.u32 %v2089, 2147483648
    %v2094 = vmul.f32 %v2090, 1.442695
    %v2095 = vpow.pop %v2094
    %v2096 = vmul.f32 %v2091, 1.442695
    %v2097 = vpow.pop %v2096
    %v2098 = vmul.f32 %v2092, 1.442695
    %v2099 = vpow.pop %v2098
    %v2100 = vmul.f32 %v2093, 1.442695
    %v2101 = vpow.pop %v2100
    %v2102 = vadd.f32 %v2095, 1.0
    %v2103 = vadd.f32 %v2097, 1.0
    %v2104 = vadd.f32 %v2099, 1.0
    %v2105 = vadd.f32 %v2101, 1.0
    %v2106 = vrcp.pop %v2102
    %v2107 = vmul.f32 %v2102, %v2106
    %v2108 = vsub.f32 1.0, %v2107
    %v2109 = vmul.f32 %v2106, %v2108
    %v2110 = vadd.f32 %v2106, %v2109
    %vm2111 = vweird.f32 %v2102
    %vm2112 = vweird.f32 %v2106
    %vm2113 = vmor %vm2111, %vm2112
    %v2114 = vsel %vm2113, %v2106, %v2110
    %v2115 = vand.u32 2147483647, %v2102
    %vm2116 = vcmp.eq.f32.partialorder %v2115, 8.507059e+37
    %v2117 = vand.u32 %v2102, 2147483648
    %v2118 = vor.u32 1.1754944e-38, %v2117
    %v2119 = vsel %vm2116, %v2118, %v2114
    %v2120 = vmul.f32 1.0, %v2119
    %v2121 = vrcp.pop %v2103
    %v2122 = vmul.f32 %v2103, %v2121
    %v2123 = vsub.f32 1.0, %v2122
    %v2124 = vmul.f32 %v2121, %v2123
    %v2125 = vadd.f32 %v2121, %v2124
    %vm2126 = vweird.f32 %v2103
    %vm2127 = vweird.f32 %v2121
    %vm2128 = vmor %vm2126, %vm2127
    %v2129 = vsel %vm2128, %v2121, %v2125
    %v2130 = vand.u32 2147483647, %v2103
    %vm2131 = vcmp.eq.f32.partialorder %v2130, 8.507059e+37
    %v2132 = vand.u32 %v2103, 2147483648
    %v2133 = vor.u32 1.1754944e-38, %v2132
    %v2134 = vsel %vm2131, %v2133, %v2129
    %v2135 = vmul.f32 1.0, %v2134
    %v2136 = vrcp.pop %v2104
    %v2137 = vmul.f32 %v2104, %v2136
    %v2138 = vsub.f32 1.0, %v2137
    %v2139 = vmul.f32 %v2136, %v2138
    %v2140 = vadd.f32 %v2136, %v2139
    %vm2141 = vweird.f32 %v2104
    %vm2142 = vweird.f32 %v2136
    %vm2143 = vmor %vm2141, %vm2142
    %v2144 = vsel %vm2143, %v2136, %v2140
    %v2145 = vand.u32 2147483647, %v2104
    %vm2146 = vcmp.eq.f32.partialorder %v2145, 8.507059e+37
    %v2147 = vand.u32 %v2104, 2147483648
    %v2148 = vor.u32 1.1754944e-38, %v2147
    %v2149 = vsel %vm2146, %v2148, %v2144
    %v2150 = vmul.f32 1.0, %v2149
    %v2151 = vrcp.pop %v2105
    %v2152 = vmul.f32 %v2105, %v2151
    %v2153 = vsub.f32 1.0, %v2152
    %v2154 = vmul.f32 %v2151, %v2153
    %v2155 = vadd.f32 %v2151, %v2154
    %vm2156 = vweird.f32 %v2105
    %vm2157 = vweird.f32 %v2151
    %vm2158 = vmor %vm2156, %vm2157
    %v2159 = vsel %vm2158, %v2151, %v2155
    %v2160 = vand.u32 2147483647, %v2105
    %vm2161 = vcmp.eq.f32.partialorder %v2160, 8.507059e+37
    %v2162 = vand.u32 %v2105, 2147483648
    %v2163 = vor.u32 1.1754944e-38, %v2162
    %v2164 = vsel %vm2161, %v2163, %v2159
    %v2165 = vmul.f32 1.0, %v2164
    %v2166 = vtanh.pop %v2087
    %v2167 = vtanh.pop %v2089
    %v2168 = vmul.f32 %v2120, %v2035
    %v2169 = vmul.f32 %v2150, %v2036
    %2172 = vrot.lane.b32.xlu0 %v2166, 64
    %v2173 = vpop.permute.xlu0 %2172
    %2174 = vrot.lane.b32.xlu0 %v2167, 64
    %v2175 = vpop.permute.xlu0 %2174
    %v2178 = vmul.f32 %v2120, %v2173
    %v2179 = vmul.f32 %v2150, %v2175
    %2182 = vrot.lane.b32.xlu0 %v2178, 64
    %v2183 = vpop.permute.xlu0 %2182
    %2184 = vrot.lane.b32.xlu0 %v2179, 64
    %v2185 = vpop.permute.xlu0 %2184
    %v2188 = vadd.f32 %v2168, %v2183
    %v2189 = vadd.f32 %v2169, %v2185
    %v2190 = vtanh.pop %v2188
    %v2191 = vtanh.pop %v2189
    %2194 = vrot.lane.b32.xlu0 %v2190, 64
    %v2195 = vpop.permute.xlu0 %2194
    %2196 = vrot.lane.b32.xlu0 %v2191, 64
    %v2197 = vpop.permute.xlu0 %2196
    %v2200 = vmul.f32 %v2135, %v2195
    %v2201 = vmul.f32 %v2165, %v2197
    %s2202 = scalar_lea.vmem [#allocation2], 224
    %v2203 = vld [vmem:[%s2202] sm:$0xff]
    %v2204 = vld [vmem:[%s2202 + $0x8] sm:$0xff]
    %v2205 = vld [vmem:[%s2202 + $0x10] sm:$0xff]
    %v2206 = vld [vmem:[%s2202 + $0x18] sm:$0xff]
    %v2207 = vpack.c.bf16 %v2201, %v2200
    %v2209 = vsel %vm930, %v2207, 0
    %2211 = vmatpush.bf16.msra.mxu0 0
    %2212 = vmatpush.bf16.msra.mxu0 0
    %2213 = vmatpush.bf16.msra.mxu0 0
    %2214 = vmatpush.bf16.msra.mxu0 0
    %2215 = vmatpush.bf16.msra.mxu0 %v1127
    %2216 = vmatpush.bf16.msra.mxu0 %v1125
    %2217 = vmatpush.bf16.msra.mxu0 %v1123
    %2218 = vmatpush.bf16.msra.mxu0 %v1121
    %2219 = vmatmul.bf16.gmra.mxu0 %v2209
    %v2220 = vpop.f32.mrf.mxu0
    %v2221 = vadd.f32 0.0, %v2220
    %v2222 = vpop.f32.mrf.mxu0
    %v2223 = vadd.f32 0.0, %v2222
    %2224 = vdwg.mxu0
    %2225 = vmatpush.bf16.msra.mxu0 0
    %2226 = vmatpush.bf16.msra.mxu0 0
    %2227 = vmatpush.bf16.msra.mxu0 0
    %2228 = vmatpush.bf16.msra.mxu0 0
    %2229 = vmatpush.bf16.msra.mxu0 %v1128
    %2230 = vmatpush.bf16.msra.mxu0 %v1126
    %2231 = vmatpush.bf16.msra.mxu0 %v1124
    %2232 = vmatpush.bf16.msra.mxu0 %v1122
    %2233 = vmatmul.bf16.gmra.mxu0 %v2209
    %v2234 = vpop.f32.mrf.mxu0
    %v2235 = vadd.f32 0.0, %v2234
    %v2236 = vpop.f32.mrf.mxu0
    %v2237 = vadd.f32 0.0, %v2236
    %2238 = vdwg.mxu0
    %v2239 = vadd.f32 %v2203, %v2221
    %v2240 = vadd.f32 %v2204, %v2235
    %v2241 = vadd.f32 %v2205, %v2223
    %v2242 = vadd.f32 %v2206, %v2237
    %v2243 = vxor.u32 %v2239, 2147483648
    %v2244 = vxor.u32 %v2240, 2147483648
    %v2245 = vxor.u32 %v2241, 2147483648
    %v2246 = vxor.u32 %v2242, 2147483648
    %v2247 = vmul.f32 %v2243, 1.442695
    %v2248 = vpow.pop %v2247
    %v2249 = vmul.f32 %v2244, 1.442695
    %v2250 = vpow.pop %v2249
    %v2251 = vmul.f32 %v2245, 1.442695
    %v2252 = vpow.pop %v2251
    %v2253 = vmul.f32 %v2246, 1.442695
    %v2254 = vpow.pop %v2253
    %v2255 = vadd.f32 %v2248, 1.0
    %v2256 = vadd.f32 %v2250, 1.0
    %v2257 = vadd.f32 %v2252, 1.0
    %v2258 = vadd.f32 %v2254, 1.0
    %v2259 = vrcp.pop %v2255
    %v2260 = vmul.f32 %v2255, %v2259
    %v2261 = vsub.f32 1.0, %v2260
    %v2262 = vmul.f32 %v2259, %v2261
    %v2263 = vadd.f32 %v2259, %v2262
    %vm2264 = vweird.f32 %v2255
    %vm2265 = vweird.f32 %v2259
    %vm2266 = vmor %vm2264, %vm2265
    %v2267 = vsel %vm2266, %v2259, %v2263
    %v2268 = vand.u32 2147483647, %v2255
    %vm2269 = vcmp.eq.f32.partialorder %v2268, 8.507059e+37
    %v2270 = vand.u32 %v2255, 2147483648
    %v2271 = vor.u32 1.1754944e-38, %v2270
    %v2272 = vsel %vm2269, %v2271, %v2267
    %v2273 = vmul.f32 1.0, %v2272
    %v2274 = vrcp.pop %v2256
    %v2275 = vmul.f32 %v2256, %v2274
    %v2276 = vsub.f32 1.0, %v2275
    %v2277 = vmul.f32 %v2274, %v2276
    %v2278 = vadd.f32 %v2274, %v2277
    %vm2279 = vweird.f32 %v2256
    %vm2280 = vweird.f32 %v2274
    %vm2281 = vmor %vm2279, %vm2280
    %v2282 = vsel %vm2281, %v2274, %v2278
    %v2283 = vand.u32 2147483647, %v2256
    %vm2284 = vcmp.eq.f32.partialorder %v2283, 8.507059e+37
    %v2285 = vand.u32 %v2256, 2147483648
    %v2286 = vor.u32 1.1754944e-38, %v2285
    %v2287 = vsel %vm2284, %v2286, %v2282
    %v2288 = vmul.f32 1.0, %v2287
    %v2289 = vrcp.pop %v2257
    %v2290 = vmul.f32 %v2257, %v2289
    %v2291 = vsub.f32 1.0, %v2290
    %v2292 = vmul.f32 %v2289, %v2291
    %v2293 = vadd.f32 %v2289, %v2292
    %vm2294 = vweird.f32 %v2257
    %vm2295 = vweird.f32 %v2289
    %vm2296 = vmor %vm2294, %vm2295
    %v2297 = vsel %vm2296, %v2289, %v2293
    %v2298 = vand.u32 2147483647, %v2257
    %vm2299 = vcmp.eq.f32.partialorder %v2298, 8.507059e+37
    %v2300 = vand.u32 %v2257, 2147483648
    %v2301 = vor.u32 1.1754944e-38, %v2300
    %v2302 = vsel %vm2299, %v2301, %v2297
    %v2303 = vmul.f32 1.0, %v2302
    %v2304 = vrcp.pop %v2258
    %v2305 = vmul.f32 %v2258, %v2304
    %v2306 = vsub.f32 1.0, %v2305
    %v2307 = vmul.f32 %v2304, %v2306
    %v2308 = vadd.f32 %v2304, %v2307
    %vm2309 = vweird.f32 %v2258
    %vm2310 = vweird.f32 %v2304
    %vm2311 = vmor %vm2309, %vm2310
    %v2312 = vsel %vm2311, %v2304, %v2308
    %v2313 = vand.u32 2147483647, %v2258
    %vm2314 = vcmp.eq.f32.partialorder %v2313, 8.507059e+37
    %v2315 = vand.u32 %v2258, 2147483648
    %v2316 = vor.u32 1.1754944e-38, %v2315
    %v2317 = vsel %vm2314, %v2316, %v2312
    %v2318 = vmul.f32 1.0, %v2317
    %v2319 = vtanh.pop %v2240
    %v2320 = vtanh.pop %v2242
    %v2321 = vmul.f32 %v2273, %v2188
    %v2322 = vmul.f32 %v2303, %v2189
    %2325 = vrot.lane.b32.xlu0 %v2319, 64
    %v2326 = vpop.permute.xlu0 %2325
    %2327 = vrot.lane.b32.xlu0 %v2320, 64
    %v2328 = vpop.permute.xlu0 %2327
    %v2331 = vmul.f32 %v2273, %v2326
    %v2332 = vmul.f32 %v2303, %v2328
    %2335 = vrot.lane.b32.xlu0 %v2331, 64
    %v2336 = vpop.permute.xlu0 %2335
    %2337 = vrot.lane.b32.xlu0 %v2332, 64
    %v2338 = vpop.permute.xlu0 %2337
    %v2341 = vadd.f32 %v2321, %v2336
    %v2342 = vadd.f32 %v2322, %v2338
    %v2343 = vtanh.pop %v2341
    %v2344 = vtanh.pop %v2342
    %2347 = vrot.lane.b32.xlu0 %v2343, 64
    %v2348 = vpop.permute.xlu0 %2347
    %2349 = vrot.lane.b32.xlu0 %v2344, 64
    %v2350 = vpop.permute.xlu0 %2349
    %v2353 = vmul.f32 %v2288, %v2348
    %v2354 = vmul.f32 %v2318, %v2350
    %v2355 = vpack.c.bf16 %v2354, %v2353
    %v2356 = vld [vmem:[#allocation6] sm:$0xf]
    %v2357 = vld [vmem:[#allocation6 + $0x4] sm:$0xf]
    %v2358 = vld [vmem:[#allocation6 + $0x8] sm:$0xf]
    %v2359 = vld [vmem:[#allocation6 + $0xc] sm:$0xf]
    %v2360 = vld [vmem:[#allocation6 + $0x10] sm:$0xf]
    %v2361 = vld [vmem:[#allocation6 + $0x14] sm:$0xf]
    %v2362 = vld [vmem:[#allocation6 + $0x18] sm:$0xf]
    %v2363 = vld [vmem:[#allocation6 + $0x1c] sm:$0xf]
    %v2364 = vld [vmem:[%s9] sm:$0x1]
    %v2366 = vperm.slane %v2364, 0
    %v2376 = vunpack.c.l.b16 %v2356
    %v2377 = vunpack.c.l.b16 %v2357
    %v2378 = vunpack.c.l.b16 %v2358
    %v2379 = vunpack.c.l.b16 %v2359
    %v2380 = vunpack.c.l.b16 %v2360
    %v2381 = vunpack.c.l.b16 %v2361
    %v2382 = vunpack.c.l.b16 %v2362
    %v2383 = vunpack.c.l.b16 %v2363
    %v2384 = vpack.c.b16 %v2377, %v2376
    %v2385 = vpack.c.b16 %v2379, %v2378
    %v2386 = vpack.c.b16 %v2381, %v2380
    %v2387 = vpack.c.b16 %v2383, %v2382
    %v2393 = vsel %vm930, %v2355, 0
    %2395 = vmatpush.bf16.msra.mxu0 0
    %2396 = vmatpush.bf16.msra.mxu0 0
    %2397 = vmatpush.bf16.msra.mxu0 0
    %2398 = vmatpush.bf16.msra.mxu0 0
    %2399 = vmatpush.bf16.msra.mxu0 %v2387
    %2400 = vmatpush.bf16.msra.mxu0 %v2386
    %2401 = vmatpush.bf16.msra.mxu0 %v2385
    %2402 = vmatpush.bf16.msra.mxu0 %v2384
    %2403 = vmatmul.bf16.gmra.mxu0 %v2393
    %v2404 = vpop.f32.mrf.mxu0
    %v2405 = vadd.f32 %v2366, %v2404
    %v2406 = vpop.f32.mrf.mxu0
    %v2407 = vadd.f32 %v2366, %v2406
    %2408 = vdwg.mxu0
    %2409 = vst [vmem:[#allocation8] sm:$0xff] %v2405
    %2410 = vst [vmem:[#allocation8 + $0x8] sm:$0xff] %v2407
    // Predicated region
    $region50: #{tpu_custom_call.1} parent=1 // pred_check
      _
    $region51: #{tpu_custom_call.1} parent=1 // pred_check_branch
      %2412 = sbr.rel (0) target = $region53
    $region52: #{tpu_custom_call.1} parent=1 // pred_region
      %2414 = vsyncadd [#allocation5], 0
      %s2415 = sshll.u32 [#allocation8], 4
      %s2416 = int_to_ptr.vmem [resolvable:$true] %s2415
      %s2417 = sshll.u32 %s10, 4
      %s2418 = int_to_ptr.hbm [resolvable:$true] %s2417
      %2423 = dma.vmem_to_hbm [thread:$0]  %s2416, 256, %s2418, [#allocation5], 128, 128, 8
    $region53: #{tpu_custom_call.1} parent=1 // pred_fallthru
      _
    // Predicated region
    $region54: #{tpu_custom_call.1} parent=1 // pred_check
      _
    $region55: #{tpu_custom_call.1} parent=1 // pred_check_branch
      %2425 = sbr.rel (0) target = $region57
    $region56: #{tpu_custom_call.1} parent=1 // pred_region
      %2427 = dma.done [#allocation5], 256
    $region57: #{tpu_custom_call.1} parent=1 // pred_fallthru
      _
    %2428 = vsyncpa [#allocation4], 1
    %2429 = vsyncpa [#allocation7], 1
    %2430 = vsyncpa [#allocation5], 1

</llo_original>
